<compile_context>
chip_gen: v7x
topology: tpu7x:2x2x1
jax: 0.10.0
libtpu: 0.0.40
codegen_flags: <defaults>
</compile_context>

<pallas_src>
import jax
import jax.numpy as jnp
from jax.experimental import pallas as pl
from jax.experimental.pallas import tpu as pltpu


# ----------------------------------------------------------------------------
# Kernel
# ----------------------------------------------------------------------------
def dbn_kernel(x_ref,
               w1_ref, b1_ref,
               w2_ref, b2_ref,
               w3_ref, b3_ref,
               wfc_ref, bfc_ref,
               out_ref):
    def sigmoid(z):
        # Exact sigmoid via a single EUP tanh (same free slot as exp/recip,
        # one fewer VALU op, no approx error compounding across layers).
        return 0.5 * jnp.tanh(0.5 * z) + 0.5

    # Layer 1: P(h|v) = sigmoid(v @ W + b); bf16 MXU operands, f32 accumulate.
    h = jnp.dot(x_ref[...], w1_ref[...], preferred_element_type=jnp.float32)
    h = sigmoid(h + b1_ref[...])
    # Layer 2
    h = jnp.dot(h.astype(jnp.bfloat16), w2_ref[...],
                preferred_element_type=jnp.float32)
    h = sigmoid(h + b2_ref[...])
    # Layer 3 (output columns zero-padded 64 -> 128; padded units hit zero
    # fc rows below, so the padding is inert).
    h = jnp.dot(h.astype(jnp.bfloat16), w3_ref[...],
                preferred_element_type=jnp.float32)
    h = sigmoid(h + b3_ref[...])
    # Linear classifier head (no activation); lane-dense (padded) output.
    out = jnp.dot(h.astype(jnp.bfloat16), wfc_ref[...],
                  preferred_element_type=jnp.float32)
    out_ref[...] = (out + bfc_ref[...]).astype(out_ref.dtype)


# ----------------------------------------------------------------------------
# Device / tiling helpers
# ----------------------------------------------------------------------------
def _num_tensorcores():
    """TensorCores visible to this kernel's grid (1 on v5e/v6e, 2 on v7x)."""
    try:
        info = pltpu.get_tpu_info()
        for attr in ("num_cores", "tensorcore_count", "core_count",
                     "num_tensorcores"):
            v = getattr(info, attr, None)
            if v:
                return max(1, int(v))
    except Exception:
        pass
    try:
        kind = jax.devices()[0].device_kind.lower()
        if "v7" in kind:
            return 2
    except Exception:
        pass
    return 1


def _choose_tiling(batch, n_cores, row_mult=16):
    """One grid step per TensorCore; tile rows rounded to a bf16-friendly 16.

    At these model dims (K,N <= 128, ~40 MFLOP total) MXU fill is capped by
    K/N regardless of the row count, so tile_b is chosen purely to minimize
    padding and per-step overhead.
    """
    n_tiles = max(1, min(int(n_cores), pl.cdiv(batch, row_mult)))
    tile_b = pl.cdiv(batch, n_tiles)
    tile_b = ((tile_b + row_mult - 1) // row_mult) * row_mult
    return tile_b, n_tiles, tile_b * n_tiles


# ----------------------------------------------------------------------------
# Wrapper
# ----------------------------------------------------------------------------
def dbn_forward(x, params, n_classes, n_cores=None):
    """params = (w1,b1,w2,b2,w3,b3,wfc_t,bfc) -- already padded (see
    prepare_params). x is (batch, n_visible) float32."""
    w1, b1, w2, b2, w3, b3, wfc, bfc = params
    batch, n_vis = x.shape
    k_pad, h1 = w1.shape
    h2 = w2.shape[1]
    h3 = w3.shape[1]          # already padded to 128
    n_pad = wfc.shape[1]

    if n_cores is None:
        n_cores = _num_tensorcores()
    tile_b, n_tiles, b_pad = _choose_tiling(batch, n_cores)

    # Pad batch to the (small) tile multiple, features 49 -> 64, cast to bf16
    # in the wrapper so the x DMA is half-width and the kernel has no cast.
    x_p = jnp.pad(x.astype(jnp.float32),
                  ((0, b_pad - batch), (0, k_pad - n_vis))).astype(jnp.bfloat16)

    # Scheduler hints for XLA around the custom call.
    flops = 2 * b_pad * (k_pad * h1 + h1 * h2 + h2 * h3 + h3 * n_pad)
    transcendentals = b_pad * (h1 + h2 + h3)      # one tanh per sigmoid
    bytes_accessed = (x_p.size * x_p.dtype.itemsize + b_pad * n_pad * 4
                      + sum(int(p.size) * p.dtype.itemsize for p in params))

    weight_spec = lambda shape: pl.BlockSpec(shape, lambda i: (0, 0))

    out = pl.pallas_call(
        dbn_kernel,
        out_shape=jax.ShapeDtypeStruct((b_pad, n_pad), jnp.float32),
        grid=(n_tiles,),
        in_specs=[
            pl.BlockSpec((tile_b, k_pad), lambda i: (i, 0)),   # x tile (bf16)
            weight_spec((k_pad, h1)), weight_spec((1, h1)),    # layer 1
            weight_spec((h1, h2)),    weight_spec((1, h2)),    # layer 2
            weight_spec((h2, h3)),    weight_spec((1, h3)),    # layer 3
            weight_spec((h3, n_pad)), weight_spec((1, n_pad)), # fc head
        ],
        out_specs=pl.BlockSpec((tile_b, n_pad), lambda i: (i, 0)),
        compiler_params=pltpu.CompilerParams(
            dimension_semantics=("parallel",)),
        cost_estimate=pl.CostEstimate(
            flops=flops,
            transcendentals=transcendentals,
            bytes_accessed=bytes_accessed),
    )(x_p, *params)

    return out[:batch, :n_classes]


# ----------------------------------------------------------------------------
# Parameters (deterministic synthetic, matching the DBN __init__ shapes)
# ----------------------------------------------------------------------------
def make_params(key, n_visible=49, n_hidden=(128, 128, 64), n_classes=6):
    """Logical f32 params in PyTorch layout: RBM W_i is (in, out), fc weight is
    (n_classes, n_hidden[-1]) as in nn.Linear."""
    ks = jax.random.split(key, 2 * len(n_hidden) + 2)
    sizes = (n_visible,) + tuple(n_hidden)
    layers = []
    for i in range(len(n_hidden)):
        w = 0.01 * jax.random.normal(ks[2 * i], (sizes[i], sizes[i + 1]),
                                     dtype=jnp.float32)
        b = jnp.zeros((sizes[i + 1],), dtype=jnp.float32)
        layers.append((w, b))
    wfc = 0.1 * jax.random.normal(ks[-2], (n_classes, n_hidden[-1]),
                                  dtype=jnp.float32)
    bfc = 0.01 * jax.random.normal(ks[-1], (n_classes,), dtype=jnp.float32)
    return layers, (wfc, bfc)


def prepare_params(layers, fc, lane=128, k_mult=16):
    """Pad K (49->64, multiple of 16 for bf16 packing), pad the last hidden
    layer (64->128, zero cols/bias + zero fc K rows so padding is exact), pad
    n_classes (6->128), pre-transpose the fc weight, cast weights to bf16
    (f32 biases).  Returns (params, n_classes)."""
    (w1, b1), (w2, b2), (w3, b3) = layers
    wfc, bfc = fc

    # K padding for layer 1 (bf16 packs 16 sublanes per vreg).
    k = w1.shape[0]
    k_pad = ((k + k_mult - 1) // k_mult) * k_mult
    w1p = jnp.pad(w1, ((0, k_pad - k), (0, 0)))

    # Hidden 64 -> 128: pad w3 output cols + b3 with zeros; the matching fc
    # rows are zero-padded below so the padded (sigmoid(0)=0.5) units are inert.
    h3 = w3.shape[1]
    h3_pad = ((h3 + lane - 1) // lane) * lane
    w3p = jnp.pad(w3, ((0, 0), (0, h3_pad - h3)))
    b3p = jnp.pad(b3, (0, h3_pad - h3))

    # fc head: transpose, pad K rows (64->128, zeros) and N cols (6->128).
    n_classes = wfc.shape[0]
    n_pad = ((n_classes + lane - 1) // lane) * lane
    wfc_t = jnp.pad(wfc.T, ((0, h3_pad - h3), (0, n_pad - n_classes)))
    bfc_p = jnp.pad(bfc, (0, n_pad - n_classes))

    params = (w1p.astype(jnp.bfloat16), b1.reshape(1, -1),
              w2.astype(jnp.bfloat16),  b2.reshape(1, -1),
              w3p.astype(jnp.bfloat16), b3p.reshape(1, -1),
              wfc_t.astype(jnp.bfloat16), bfc_p.reshape(1, -1))
    return params, n_classes


# ----------------------------------------------------------------------------
# Pure-JAX reference (same bf16-operand / f32-accumulate math as the kernel,
# exact sigmoid).
# ----------------------------------------------------------------------------
def dbn_reference(x, params, n_classes):
    w1, b1, w2, b2, w3, b3, wfc, bfc = params
    k_pad = w1.shape[0]
    xp = jnp.pad(x.astype(jnp.float32),
                 ((0, 0), (0, k_pad - x.shape[1]))).astype(jnp.bfloat16)

    def layer(h, w, b):
        z = jnp.dot(h.astype(jnp.bfloat16), w,
                    preferred_element_type=jnp.float32) + b
        return jax.nn.sigmoid(z)

    h = layer(xp, w1, b1)
    h = layer(h, w2, b2)
    h = layer(h, w3, b3)
    out = jnp.dot(h.astype(jnp.bfloat16), wfc,
                  preferred_element_type=jnp.float32) + bfc
    return out[:, :n_classes]


# ----------------------------------------------------------------------------
if __name__ == "__main__":
    key = jax.random.PRNGKey(0)
    k_x, k_p = jax.random.split(key)

    batch, n_visible, n_hidden, n_classes = 300, 49, (128, 128, 64), 6
    x = jax.random.uniform(k_x, (batch, n_visible), dtype=jnp.float32)

    layers, fc = make_params(k_p, n_visible=n_visible,
                             n_hidden=n_hidden, n_classes=n_classes)
    params, n_classes = prepare_params(layers, fc)

    out = dbn_forward(x, params, n_classes)
    out = jax.block_until_ready(out)

    ref = dbn_reference(x, params, n_classes)
    assert out.shape == (batch, n_classes), out.shape
    assert jnp.allclose(out, ref, atol=5e-3, rtol=5e-3), "mismatch vs reference"

    print("KERNEL_OK")
</pallas_src>

<mosaic_0001>
module attributes {stable_mosaic.version = 11 : i64} {
  func.func @dbn_kernel(%arg0: i32, %arg1: memref<304x64xbf16, #tpu.memory_space<vmem>>, %arg2: memref<64x128xbf16, #tpu.memory_space<vmem>>, %arg3: memref<1x128xf32, #tpu.memory_space<vmem>>, %arg4: memref<128x128xbf16, #tpu.memory_space<vmem>>, %arg5: memref<1x128xf32, #tpu.memory_space<vmem>>, %arg6: memref<128x128xbf16, #tpu.memory_space<vmem>>, %arg7: memref<1x128xf32, #tpu.memory_space<vmem>>, %arg8: memref<128x128xbf16, #tpu.memory_space<vmem>>, %arg9: memref<1x128xf32, #tpu.memory_space<vmem>>, %arg10: memref<304x128xf32, #tpu.memory_space<vmem>>) attributes {dimension_semantics = [#tpu.dimension_semantics<parallel>], iteration_bounds = array<i64: 1>, scalar_prefetch = 0 : i64, scratch_operands = 0 : i64, tpu.core_type = #tpu.core_type<tc>, window_params = [{transform_indices = @transform_0, window_bounds = array<i64: 304, 64>}, {pipeline_mode = #tpu.pipeline_mode<synchronous>, transform_indices = @transform_1, window_bounds = array<i64: 64, 128>}, {pipeline_mode = #tpu.pipeline_mode<synchronous>, transform_indices = @transform_2, window_bounds = array<i64: 1, 128>}, {pipeline_mode = #tpu.pipeline_mode<synchronous>, transform_indices = @transform_3, window_bounds = array<i64: 128, 128>}, {pipeline_mode = #tpu.pipeline_mode<synchronous>, transform_indices = @transform_4, window_bounds = array<i64: 1, 128>}, {pipeline_mode = #tpu.pipeline_mode<synchronous>, transform_indices = @transform_5, window_bounds = array<i64: 128, 128>}, {pipeline_mode = #tpu.pipeline_mode<synchronous>, transform_indices = @transform_6, window_bounds = array<i64: 1, 128>}, {pipeline_mode = #tpu.pipeline_mode<synchronous>, transform_indices = @transform_7, window_bounds = array<i64: 128, 128>}, {pipeline_mode = #tpu.pipeline_mode<synchronous>, transform_indices = @transform_8, window_bounds = array<i64: 1, 128>}, {transform_indices = @transform_9, window_bounds = array<i64: 304, 128>}]} {
    %c0 = arith.constant 0 : index
    %c0_0 = arith.constant 0 : index
    %0 = vector.load %arg1[%c0, %c0_0] : memref<304x64xbf16, #tpu.memory_space<vmem>>, vector<304x64xbf16>
    %c0_1 = arith.constant 0 : index
    %c0_2 = arith.constant 0 : index
    %1 = vector.load %arg2[%c0_1, %c0_2] : memref<64x128xbf16, #tpu.memory_space<vmem>>, vector<64x128xbf16>
    %cst = arith.constant dense<0.000000e+00> : vector<304x128xf32>
    %2 = tpu.matmul %0, %1, %cst {dimension_numbers = #tpu.dot_dimension_numbers<[1], [0], [0], [1], [0, 0, 1, 1], [], []>} : vector<304x64xbf16>, vector<64x128xbf16>, vector<304x128xf32> -> vector<304x128xf32>
    %c0_3 = arith.constant 0 : index
    %c0_4 = arith.constant 0 : index
    %3 = vector.load %arg3[%c0_3, %c0_4] : memref<1x128xf32, #tpu.memory_space<vmem>>, vector<1x128xf32>
    %4 = vector.broadcast %3 : vector<1x128xf32> to vector<304x128xf32>
    %5 = arith.addf %2, %4 : vector<304x128xf32>
    %cst_5 = arith.constant 5.000000e-01 : f32
    %6 = vector.broadcast %cst_5 : f32 to vector<304x128xf32>
    %7 = arith.mulf %6, %5 : vector<304x128xf32>
    %8 = math.tanh %7 : vector<304x128xf32>
    %cst_6 = arith.constant 5.000000e-01 : f32
    %9 = vector.broadcast %cst_6 : f32 to vector<304x128xf32>
    %10 = arith.mulf %9, %8 : vector<304x128xf32>
    %cst_7 = arith.constant 5.000000e-01 : f32
    %11 = vector.broadcast %cst_7 : f32 to vector<304x128xf32>
    %12 = arith.addf %10, %11 : vector<304x128xf32>
    %13 = arith.truncf %12 : vector<304x128xf32> to vector<304x128xbf16>
    %c0_8 = arith.constant 0 : index
    %c0_9 = arith.constant 0 : index
    %14 = vector.load %arg4[%c0_8, %c0_9] : memref<128x128xbf16, #tpu.memory_space<vmem>>, vector<128x128xbf16>
    %cst_10 = arith.constant dense<0.000000e+00> : vector<304x128xf32>
    %15 = tpu.matmul %13, %14, %cst_10 {dimension_numbers = #tpu.dot_dimension_numbers<[1], [0], [0], [1], [0, 0, 1, 1], [], []>} : vector<304x128xbf16>, vector<128x128xbf16>, vector<304x128xf32> -> vector<304x128xf32>
    %c0_11 = arith.constant 0 : index
    %c0_12 = arith.constant 0 : index
    %16 = vector.load %arg5[%c0_11, %c0_12] : memref<1x128xf32, #tpu.memory_space<vmem>>, vector<1x128xf32>
    %17 = vector.broadcast %16 : vector<1x128xf32> to vector<304x128xf32>
    %18 = arith.addf %15, %17 : vector<304x128xf32>
    %cst_13 = arith.constant 5.000000e-01 : f32
    %19 = vector.broadcast %cst_13 : f32 to vector<304x128xf32>
    %20 = arith.mulf %19, %18 : vector<304x128xf32>
    %21 = math.tanh %20 : vector<304x128xf32>
    %cst_14 = arith.constant 5.000000e-01 : f32
    %22 = vector.broadcast %cst_14 : f32 to vector<304x128xf32>
    %23 = arith.mulf %22, %21 : vector<304x128xf32>
    %cst_15 = arith.constant 5.000000e-01 : f32
    %24 = vector.broadcast %cst_15 : f32 to vector<304x128xf32>
    %25 = arith.addf %23, %24 : vector<304x128xf32>
    %26 = arith.truncf %25 : vector<304x128xf32> to vector<304x128xbf16>
    %c0_16 = arith.constant 0 : index
    %c0_17 = arith.constant 0 : index
    %27 = vector.load %arg6[%c0_16, %c0_17] : memref<128x128xbf16, #tpu.memory_space<vmem>>, vector<128x128xbf16>
    %cst_18 = arith.constant dense<0.000000e+00> : vector<304x128xf32>
    %28 = tpu.matmul %26, %27, %cst_18 {dimension_numbers = #tpu.dot_dimension_numbers<[1], [0], [0], [1], [0, 0, 1, 1], [], []>} : vector<304x128xbf16>, vector<128x128xbf16>, vector<304x128xf32> -> vector<304x128xf32>
    %c0_19 = arith.constant 0 : index
    %c0_20 = arith.constant 0 : index
    %29 = vector.load %arg7[%c0_19, %c0_20] : memref<1x128xf32, #tpu.memory_space<vmem>>, vector<1x128xf32>
    %30 = vector.broadcast %29 : vector<1x128xf32> to vector<304x128xf32>
    %31 = arith.addf %28, %30 : vector<304x128xf32>
    %cst_21 = arith.constant 5.000000e-01 : f32
    %32 = vector.broadcast %cst_21 : f32 to vector<304x128xf32>
    %33 = arith.mulf %32, %31 : vector<304x128xf32>
    %34 = math.tanh %33 : vector<304x128xf32>
    %cst_22 = arith.constant 5.000000e-01 : f32
    %35 = vector.broadcast %cst_22 : f32 to vector<304x128xf32>
    %36 = arith.mulf %35, %34 : vector<304x128xf32>
    %cst_23 = arith.constant 5.000000e-01 : f32
    %37 = vector.broadcast %cst_23 : f32 to vector<304x128xf32>
    %38 = arith.addf %36, %37 : vector<304x128xf32>
    %39 = arith.truncf %38 : vector<304x128xf32> to vector<304x128xbf16>
    %c0_24 = arith.constant 0 : index
    %c0_25 = arith.constant 0 : index
    %40 = vector.load %arg8[%c0_24, %c0_25] : memref<128x128xbf16, #tpu.memory_space<vmem>>, vector<128x128xbf16>
    %cst_26 = arith.constant dense<0.000000e+00> : vector<304x128xf32>
    %41 = tpu.matmul %39, %40, %cst_26 {dimension_numbers = #tpu.dot_dimension_numbers<[1], [0], [0], [1], [0, 0, 1, 1], [], []>} : vector<304x128xbf16>, vector<128x128xbf16>, vector<304x128xf32> -> vector<304x128xf32>
    %c0_27 = arith.constant 0 : index
    %c0_28 = arith.constant 0 : index
    %42 = vector.load %arg9[%c0_27, %c0_28] : memref<1x128xf32, #tpu.memory_space<vmem>>, vector<1x128xf32>
    %43 = vector.broadcast %42 : vector<1x128xf32> to vector<304x128xf32>
    %44 = arith.addf %41, %43 : vector<304x128xf32>
    %c0_29 = arith.constant 0 : index
    %c0_30 = arith.constant 0 : index
    %45 = vector.load %arg10[%c0_29, %c0_30] : memref<304x128xf32, #tpu.memory_space<vmem>>, vector<304x128xf32>
    tpu.vector_store %arg10[%c0_29, %c0_30], %44 {strides = array<i32>} : memref<304x128xf32, #tpu.memory_space<vmem>>, vector<304x128xf32>,
    return
  }
  func.func @transform_0(%arg0: i32) -> (i32, i32) {
    %c0_i32 = arith.constant 0 : i32
    %c0_i32_0 = arith.constant 0 : i32
    return %arg0, %c0_i32 : i32, i32
  }
  func.func @transform_1(%arg0: i32) -> (i32, i32) {
    %c0_i32 = arith.constant 0 : i32
    %c0_i32_0 = arith.constant 0 : i32
    %c0_i32_1 = arith.constant 0 : i32
    return %c0_i32, %c0_i32_0 : i32, i32
  }
  func.func @transform_2(%arg0: i32) -> (i32, i32) {
    %c0_i32 = arith.constant 0 : i32
    %c0_i32_0 = arith.constant 0 : i32
    %c0_i32_1 = arith.constant 0 : i32
    return %c0_i32, %c0_i32_0 : i32, i32
  }
  func.func @transform_3(%arg0: i32) -> (i32, i32) {
    %c0_i32 = arith.constant 0 : i32
    %c0_i32_0 = arith.constant 0 : i32
    %c0_i32_1 = arith.constant 0 : i32
    return %c0_i32, %c0_i32_0 : i32, i32
  }
  func.func @transform_4(%arg0: i32) -> (i32, i32) {
    %c0_i32 = arith.constant 0 : i32
    %c0_i32_0 = arith.constant 0 : i32
    %c0_i32_1 = arith.constant 0 : i32
    return %c0_i32, %c0_i32_0 : i32, i32
  }
  func.func @transform_5(%arg0: i32) -> (i32, i32) {
    %c0_i32 = arith.constant 0 : i32
    %c0_i32_0 = arith.constant 0 : i32
    %c0_i32_1 = arith.constant 0 : i32
    return %c0_i32, %c0_i32_0 : i32, i32
  }
  func.func @transform_6(%arg0: i32) -> (i32, i32) {
    %c0_i32 = arith.constant 0 : i32
    %c0_i32_0 = arith.constant 0 : i32
    %c0_i32_1 = arith.constant 0 : i32
    return %c0_i32, %c0_i32_0 : i32, i32
  }
  func.func @transform_7(%arg0: i32) -> (i32, i32) {
    %c0_i32 = arith.constant 0 : i32
    %c0_i32_0 = arith.constant 0 : i32
    %c0_i32_1 = arith.constant 0 : i32
    return %c0_i32, %c0_i32_0 : i32, i32
  }
  func.func @transform_8(%arg0: i32) -> (i32, i32) {
    %c0_i32 = arith.constant 0 : i32
    %c0_i32_0 = arith.constant 0 : i32
    %c0_i32_1 = arith.constant 0 : i32
    return %c0_i32, %c0_i32_0 : i32, i32
  }
  func.func @transform_9(%arg0: i32) -> (i32, i32) {
    %c0_i32 = arith.constant 0 : i32
    %c0_i32_0 = arith.constant 0 : i32
    return %arg0, %c0_i32 : i32, i32
  }
}

</mosaic_0001>

<llo_original>
// kernel: tpu_custom_call.1
$region0: #{tpu_custom_call.1}
  #allocation0 [shape = 'u32[]', space=smem, size = 0x4, offset = 0x4, fixed_abs, tag = 'smem constant byte address 0x4 - core index']
  #allocation1 [shape = 'u32[144,128]{1,0:T(1,128)}', space=vmem, size = 0x12000, scoped, tag = 'internal scratch']
  %s0 = inlined_call_operand.vmem [shape: bf16[304,64], index: 0, kind: input, shape index: {}]
  %s1 = inlined_call_operand.vmem [shape: bf16[64,128], index: 1, kind: input, shape index: {}]
  %s2 = inlined_call_operand.vmem [shape: f32[1,128], index: 2, kind: input, shape index: {}]
  %s3 = inlined_call_operand.vmem [shape: bf16[128,128], index: 3, kind: input, shape index: {}]
  %s4 = inlined_call_operand.vmem [shape: f32[1,128], index: 4, kind: input, shape index: {}]
  %s5 = inlined_call_operand.vmem [shape: bf16[128,128], index: 5, kind: input, shape index: {}]
  %s6 = inlined_call_operand.vmem [shape: f32[1,128], index: 6, kind: input, shape index: {}]
  %s7 = inlined_call_operand.vmem [shape: bf16[128,128], index: 7, kind: input, shape index: {}]
  %s8 = inlined_call_operand.vmem [shape: f32[1,128], index: 8, kind: input, shape index: {}]
  %s9 = inlined_call_operand.hbm [shape: f32[304,128], index: 9, kind: output, shape index: {}]
  %s10 = sld [smem:[#allocation0]]
  $region46: #{tpu_custom_call.1} parent=0
    _
  %s12 = ssub.s32 1, %s10
  %s13 = scalar_select 0, %s12, %s10
  $region1: #{tpu_custom_call.1} parent=0
    #allocation2 [shape = 'u8[155648]{0}', space=vmem, size = 0x26000, scoped, tag = 'output window, operand 0, single buffered']
    #allocation3 [shape = 's32[1]{0}', space=sflag, size = 0x4, scoped, tag = 'scoped memory for tpu_custom_call.1']
    %14 = vsyncpa [#allocation3], 0
    // Predicated region
    $region2: #{tpu_custom_call.1} parent=1 // pred_check
      _
    $region3: #{tpu_custom_call.1} parent=1 // pred_check_branch
      %16 = sbr.rel (0) target = $region5
    $region4: #{tpu_custom_call.1} parent=1 // pred_region
      _
    $region5: #{tpu_custom_call.1} parent=1 // pred_fallthru
      _
    // Predicated region
    $region6: #{tpu_custom_call.1} parent=1 // pred_check
      _
    $region7: #{tpu_custom_call.1} parent=1 // pred_check_branch
      %18 = sbr.rel (0) target = $region9
    $region8: #{tpu_custom_call.1} parent=1 // pred_region
      _
    $region9: #{tpu_custom_call.1} parent=1 // pred_fallthru
      _
    // Predicated region
    $region10: #{tpu_custom_call.1} parent=1 // pred_check
      _
    $region11: #{tpu_custom_call.1} parent=1 // pred_check_branch
      %20 = sbr.rel (0) target = $region13
    $region12: #{tpu_custom_call.1} parent=1 // pred_region
      _
    $region13: #{tpu_custom_call.1} parent=1 // pred_fallthru
      _
    // Predicated region
    $region14: #{tpu_custom_call.1} parent=1 // pred_check
      _
    $region15: #{tpu_custom_call.1} parent=1 // pred_check_branch
      %22 = sbr.rel (0) target = $region17
    $region16: #{tpu_custom_call.1} parent=1 // pred_region
      _
    $region17: #{tpu_custom_call.1} parent=1 // pred_fallthru
      _
    // Predicated region
    $region18: #{tpu_custom_call.1} parent=1 // pred_check
      _
    $region19: #{tpu_custom_call.1} parent=1 // pred_check_branch
      %24 = sbr.rel (0) target = $region21
    $region20: #{tpu_custom_call.1} parent=1 // pred_region
      _
    $region21: #{tpu_custom_call.1} parent=1 // pred_fallthru
      _
    // Predicated region
    $region22: #{tpu_custom_call.1} parent=1 // pred_check
      _
    $region23: #{tpu_custom_call.1} parent=1 // pred_check_branch
      %26 = sbr.rel (0) target = $region25
    $region24: #{tpu_custom_call.1} parent=1 // pred_region
      _
    $region25: #{tpu_custom_call.1} parent=1 // pred_fallthru
      _
    // Predicated region
    $region26: #{tpu_custom_call.1} parent=1 // pred_check
      _
    $region27: #{tpu_custom_call.1} parent=1 // pred_check_branch
      %28 = sbr.rel (0) target = $region29
    $region28: #{tpu_custom_call.1} parent=1 // pred_region
      _
    $region29: #{tpu_custom_call.1} parent=1 // pred_fallthru
      _
    // Predicated region
    $region30: #{tpu_custom_call.1} parent=1 // pred_check
      _
    $region31: #{tpu_custom_call.1} parent=1 // pred_check_branch
      %30 = sbr.rel (0) target = $region33
    $region32: #{tpu_custom_call.1} parent=1 // pred_region
      _
    $region33: #{tpu_custom_call.1} parent=1 // pred_fallthru
      _
    // Predicated region
    $region34: #{tpu_custom_call.1} parent=1 // pred_check
      _
    $region35: #{tpu_custom_call.1} parent=1 // pred_check_branch
      %32 = sbr.rel (0) target = $region37
    $region36: #{tpu_custom_call.1} parent=1 // pred_region
      _
    $region37: #{tpu_custom_call.1} parent=1 // pred_fallthru
      _
    %v34 = vld [vmem:[%s0] sm:$0xf]
    %v35 = vld [vmem:[%s0 + $0x4] sm:$0xf]
    %v36 = vld [vmem:[%s0 + $0x8] sm:$0xf]
    %v37 = vld [vmem:[%s0 + $0xc] sm:$0xf]
    %v38 = vld [vmem:[%s0 + $0x10] sm:$0xf]
    %v39 = vld [vmem:[%s0 + $0x14] sm:$0xf]
    %v40 = vld [vmem:[%s0 + $0x18] sm:$0xf]
    %v41 = vld [vmem:[%s0 + $0x1c] sm:$0xf]
    %v42 = vld [vmem:[%s0 + $0x20] sm:$0xf]
    %v43 = vld [vmem:[%s0 + $0x24] sm:$0xf]
    %v44 = vld [vmem:[%s0 + $0x28] sm:$0xf]
    %v45 = vld [vmem:[%s0 + $0x2c] sm:$0xf]
    %v46 = vld [vmem:[%s0 + $0x30] sm:$0xf]
    %v47 = vld [vmem:[%s0 + $0x34] sm:$0xf]
    %v48 = vld [vmem:[%s0 + $0x38] sm:$0xf]
    %v49 = vld [vmem:[%s0 + $0x3c] sm:$0xf]
    %v50 = vld [vmem:[%s0 + $0x40] sm:$0xf]
    %v51 = vld [vmem:[%s0 + $0x44] sm:$0xf]
    %v52 = vld [vmem:[%s0 + $0x48] sm:$0xf]
    %v53 = vld [vmem:[%s0 + $0x4c] sm:$0xf]
    %v54 = vld [vmem:[%s0 + $0x50] sm:$0xf]
    %v55 = vld [vmem:[%s0 + $0x54] sm:$0xf]
    %v56 = vld [vmem:[%s0 + $0x58] sm:$0xf]
    %v57 = vld [vmem:[%s0 + $0x5c] sm:$0xf]
    %v58 = vld [vmem:[%s0 + $0x60] sm:$0xf]
    %v59 = vld [vmem:[%s0 + $0x64] sm:$0xf]
    %v60 = vld [vmem:[%s0 + $0x68] sm:$0xf]
    %v61 = vld [vmem:[%s0 + $0x6c] sm:$0xf]
    %v62 = vld [vmem:[%s0 + $0x70] sm:$0xf]
    %v63 = vld [vmem:[%s0 + $0x74] sm:$0xf]
    %v64 = vld [vmem:[%s0 + $0x78] sm:$0xf]
    %v65 = vld [vmem:[%s0 + $0x7c] sm:$0xf]
    %v66 = vld [vmem:[%s0 + $0x80] sm:$0xf]
    %v67 = vld [vmem:[%s0 + $0x84] sm:$0xf]
    %v68 = vld [vmem:[%s0 + $0x88] sm:$0xf]
    %v69 = vld [vmem:[%s0 + $0x8c] sm:$0xf]
    %v70 = vld [vmem:[%s0 + $0x90] sm:$0xf]
    %v71 = vld [vmem:[%s0 + $0x94] sm:$0xf]
    %v72 = vld [vmem:[%s1] sm:$0xf]
    %v73 = vld [vmem:[%s1 + $0x4] sm:$0xf]
    %v74 = vld [vmem:[%s1 + $0x8] sm:$0xf]
    %v75 = vld [vmem:[%s1 + $0xc] sm:$0xf]
    %v76 = vld [vmem:[%s1 + $0x10] sm:$0xf]
    %v77 = vld [vmem:[%s1 + $0x14] sm:$0xf]
    %v78 = vld [vmem:[%s1 + $0x18] sm:$0xf]
    %v79 = vld [vmem:[%s1 + $0x1c] sm:$0xf]
    %v80 = vld [vmem:[%s2] sm:$0x1]
    %v82 = vlaneseq
    %v83 = vshrl.u32 %v82, 7
    %v84 = vsub.s32 0, %v83
    %v85 = vrot.slane %v80, %v84
    %v125 = vunpack.c.l.b16 %v34
    %v126 = vunpack.c.l.b16 %v35
    %v127 = vunpack.c.l.b16 %v36
    %v128 = vunpack.c.l.b16 %v37
    %v129 = vunpack.c.l.b16 %v38
    %v130 = vunpack.c.l.b16 %v39
    %v131 = vunpack.c.l.b16 %v40
    %v132 = vunpack.c.l.b16 %v41
    %v133 = vunpack.c.l.b16 %v42
    %v134 = vunpack.c.l.b16 %v43
    %v135 = vunpack.c.l.b16 %v44
    %v136 = vunpack.c.l.b16 %v45
    %v137 = vunpack.c.l.b16 %v46
    %v138 = vunpack.c.l.b16 %v47
    %v139 = vunpack.c.l.b16 %v48
    %v140 = vunpack.c.l.b16 %v49
    %v141 = vunpack.c.l.b16 %v50
    %v142 = vunpack.c.l.b16 %v51
    %v143 = vunpack.c.l.b16 %v52
    %v144 = vunpack.c.l.b16 %v53
    %v145 = vunpack.c.l.b16 %v54
    %v146 = vunpack.c.l.b16 %v55
    %v147 = vunpack.c.l.b16 %v56
    %v148 = vunpack.c.l.b16 %v57
    %v149 = vunpack.c.l.b16 %v58
    %v150 = vunpack.c.l.b16 %v59
    %v151 = vunpack.c.l.b16 %v60
    %v152 = vunpack.c.l.b16 %v61
    %v153 = vunpack.c.l.b16 %v62
    %v154 = vunpack.c.l.b16 %v63
    %v155 = vunpack.c.l.b16 %v64
    %v156 = vunpack.c.l.b16 %v65
    %v157 = vunpack.c.l.b16 %v66
    %v158 = vunpack.c.l.b16 %v67
    %v159 = vunpack.c.l.b16 %v68
    %v160 = vunpack.c.l.b16 %v69
    %v161 = vunpack.c.l.b16 %v70
    %v162 = vunpack.c.l.b16 %v71
    %v163 = vpack.c.b16 %v126, %v125
    %v164 = vpack.c.b16 %v128, %v127
    %v165 = vpack.c.b16 %v130, %v129
    %v166 = vpack.c.b16 %v132, %v131
    %v167 = vpack.c.b16 %v134, %v133
    %v168 = vpack.c.b16 %v136, %v135
    %v169 = vpack.c.b16 %v138, %v137
    %v170 = vpack.c.b16 %v140, %v139
    %v171 = vpack.c.b16 %v142, %v141
    %v172 = vpack.c.b16 %v144, %v143
    %v173 = vpack.c.b16 %v146, %v145
    %v174 = vpack.c.b16 %v148, %v147
    %v175 = vpack.c.b16 %v150, %v149
    %v176 = vpack.c.b16 %v152, %v151
    %v177 = vpack.c.b16 %v154, %v153
    %v178 = vpack.c.b16 %v156, %v155
    %v179 = vpack.c.b16 %v158, %v157
    %v180 = vpack.c.b16 %v160, %v159
    %v181 = vpack.c.b16 %v162, %v161
    %v190 = vunpack.c.l.b16 %v72
    %v191 = vunpack.c.l.b16 %v73
    %v192 = vunpack.c.l.b16 %v74
    %v193 = vunpack.c.l.b16 %v75
    %v194 = vunpack.c.l.b16 %v76
    %v195 = vunpack.c.l.b16 %v77
    %v196 = vunpack.c.l.b16 %v78
    %v197 = vunpack.c.l.b16 %v79
    %v198 = vpack.c.b16 %v191, %v190
    %v199 = vpack.c.b16 %v193, %v192
    %v200 = vpack.c.b16 %v195, %v194
    %v201 = vpack.c.b16 %v197, %v196
    %vm206 = vcmask 523264
    %v208 = vsel %vm206, %v163, 0
    %v211 = vsel %vm206, %v164, 0
    %v214 = vsel %vm206, %v165, 0
    %v217 = vsel %vm206, %v166, 0
    %v220 = vsel %vm206, %v167, 0
    %v223 = vsel %vm206, %v168, 0
    %v226 = vsel %vm206, %v169, 0
    %v229 = vsel %vm206, %v170, 0
    %v232 = vsel %vm206, %v171, 0
    %v235 = vsel %vm206, %v172, 0
    %v238 = vsel %vm206, %v173, 0
    %v241 = vsel %vm206, %v174, 0
    %v244 = vsel %vm206, %v175, 0
    %v247 = vsel %vm206, %v176, 0
    %v250 = vsel %vm206, %v177, 0
    %v253 = vsel %vm206, %v178, 0
    %v256 = vsel %vm206, %v179, 0
    %v259 = vsel %vm206, %v180, 0
    %v262 = vsel %vm206, %v181, 0
    %264 = vmatprep.subr.bf16.mxu0 0
    %265 = vmatpush1.bf16.msra.mxu0 %v198
    %266 = vmatprep.subr.bf16.mxu0 0
    %267 = vmatpush1.bf16.msra.mxu0 %v199
    %268 = vmatprep.subr.bf16.mxu0 0
    %269 = vmatpush1.bf16.msra.mxu0 %v200
    %270 = vmatprep.subr.bf16.mxu0 0
    %271 = vmatpush1.bf16.msra.mxu0 %v201
    %272 = vmatprep.subr.bf16.mxu0 0
    %273 = vmatpush1.bf16.msra.mxu0 0
    %274 = vmatprep.subr.bf16.mxu0 0
    %275 = vmatpush1.bf16.msra.mxu0 0
    %276 = vmatprep.subr.bf16.mxu0 0
    %277 = vmatpush1.bf16.msra.mxu0 0
    %278 = vmatprep.subr.bf16.mxu0 0
    %279 = vmatpush1.bf16.msra.mxu0 0
    %280 = vmatprep.subr.bf16.mxu0 0
    %281 = vmatpush1.bf16.msra.mxu0 0
    %282 = vmatprep.subr.bf16.mxu0 0
    %283 = vmatpush1.bf16.msra.mxu0 0
    %284 = vmatprep.subr.bf16.mxu0 0
    %285 = vmatpush1.bf16.msra.mxu0 0
    %286 = vmatprep.subr.bf16.mxu0 0
    %287 = vmatpush1.bf16.msra.mxu0 0
    %288 = vmatprep.subr.bf16.mxu0 0
    %289 = vmatpush1.bf16.msra.mxu0 0
    %290 = vmatprep.subr.bf16.mxu0 0
    %291 = vmatpush1.bf16.msra.mxu0 0
    %292 = vmatprep.subr.bf16.mxu0 0
    %293 = vmatpush1.bf16.msra.mxu0 0
    %294 = vmatprep.subr.bf16.mxu0 0
    %295 = vmatpush1.bf16.msra.mxu0 0
    %296 = vmatprep.mubr.bf16.mxu0 0
    %297 = vmatmul.mubr.bf16.gmra.mrb[0].mxu0 %v208
    %v298 = vpop.f32.mrb[0].mxu0
    %v299 = vadd.f32 %v85, %v298
    %v300 = vpop.f32.mrb[0].mxu0
    %v301 = vpop.f32.mrb[0].mxu0
    %v302 = vadd.f32 %v85, %v301
    %v303 = vpop.f32.mrb[0].mxu0
    %304 = vmatprep.mubr.bf16.mxu0 0
    %305 = vmatmul.mubr.bf16.gmra.mrb[0].mxu0 %v211
    %v306 = vpop.f32.mrb[0].mxu0
    %v307 = vadd.f32 %v85, %v306
    %v308 = vpop.f32.mrb[0].mxu0
    %v309 = vpop.f32.mrb[0].mxu0
    %v310 = vadd.f32 %v85, %v309
    %v311 = vpop.f32.mrb[0].mxu0
    %312 = vmatprep.mubr.bf16.mxu0 0
    %313 = vmatmul.mubr.bf16.gmra.mrb[0].mxu0 %v214
    %v314 = vpop.f32.mrb[0].mxu0
    %v315 = vadd.f32 %v85, %v314
    %v316 = vpop.f32.mrb[0].mxu0
    %v317 = vpop.f32.mrb[0].mxu0
    %v318 = vadd.f32 %v85, %v317
    %v319 = vpop.f32.mrb[0].mxu0
    %320 = vmatprep.mubr.bf16.mxu0 0
    %321 = vmatmul.mubr.bf16.gmra.mrb[0].mxu0 %v217
    %v322 = vpop.f32.mrb[0].mxu0
    %v323 = vadd.f32 %v85, %v322
    %v324 = vpop.f32.mrb[0].mxu0
    %v325 = vpop.f32.mrb[0].mxu0
    %v326 = vadd.f32 %v85, %v325
    %v327 = vpop.f32.mrb[0].mxu0
    %328 = vmatprep.mubr.bf16.mxu0 0
    %329 = vmatmul.mubr.bf16.gmra.mrb[0].mxu0 %v220
    %v330 = vpop.f32.mrb[0].mxu0
    %v331 = vadd.f32 %v85, %v330
    %v332 = vpop.f32.mrb[0].mxu0
    %v333 = vpop.f32.mrb[0].mxu0
    %v334 = vadd.f32 %v85, %v333
    %v335 = vpop.f32.mrb[0].mxu0
    %336 = vmatprep.mubr.bf16.mxu0 0
    %337 = vmatmul.mubr.bf16.gmra.mrb[0].mxu0 %v223
    %v338 = vpop.f32.mrb[0].mxu0
    %v339 = vadd.f32 %v85, %v338
    %v340 = vpop.f32.mrb[0].mxu0
    %v341 = vpop.f32.mrb[0].mxu0
    %v342 = vadd.f32 %v85, %v341
    %v343 = vpop.f32.mrb[0].mxu0
    %344 = vmatprep.mubr.bf16.mxu0 0
    %345 = vmatmul.mubr.bf16.gmra.mrb[0].mxu0 %v226
    %v346 = vpop.f32.mrb[0].mxu0
    %v347 = vadd.f32 %v85, %v346
    %v348 = vpop.f32.mrb[0].mxu0
    %v349 = vpop.f32.mrb[0].mxu0
    %v350 = vadd.f32 %v85, %v349
    %v351 = vpop.f32.mrb[0].mxu0
    %352 = vmatprep.mubr.bf16.mxu0 0
    %353 = vmatmul.mubr.bf16.gmra.mrb[0].mxu0 %v229
    %v354 = vpop.f32.mrb[0].mxu0
    %v355 = vadd.f32 %v85, %v354
    %v356 = vpop.f32.mrb[0].mxu0
    %v357 = vpop.f32.mrb[0].mxu0
    %v358 = vadd.f32 %v85, %v357
    %v359 = vpop.f32.mrb[0].mxu0
    %360 = vmatprep.mubr.bf16.mxu0 0
    %361 = vmatmul.mubr.bf16.gmra.mrb[0].mxu0 %v232
    %v362 = vpop.f32.mrb[0].mxu0
    %v363 = vadd.f32 %v85, %v362
    %v364 = vpop.f32.mrb[0].mxu0
    %v365 = vpop.f32.mrb[0].mxu0
    %v366 = vadd.f32 %v85, %v365
    %v367 = vpop.f32.mrb[0].mxu0
    %368 = vmatprep.mubr.bf16.mxu0 0
    %369 = vmatmul.mubr.bf16.gmra.mrb[0].mxu0 %v235
    %v370 = vpop.f32.mrb[0].mxu0
    %v371 = vadd.f32 %v85, %v370
    %v372 = vpop.f32.mrb[0].mxu0
    %v373 = vpop.f32.mrb[0].mxu0
    %v374 = vadd.f32 %v85, %v373
    %v375 = vpop.f32.mrb[0].mxu0
    %376 = vmatprep.mubr.bf16.mxu0 0
    %377 = vmatmul.mubr.bf16.gmra.mrb[0].mxu0 %v238
    %v378 = vpop.f32.mrb[0].mxu0
    %v379 = vadd.f32 %v85, %v378
    %v380 = vpop.f32.mrb[0].mxu0
    %v381 = vpop.f32.mrb[0].mxu0
    %v382 = vadd.f32 %v85, %v381
    %v383 = vpop.f32.mrb[0].mxu0
    %384 = vmatprep.mubr.bf16.mxu0 0
    %385 = vmatmul.mubr.bf16.gmra.mrb[0].mxu0 %v241
    %v386 = vpop.f32.mrb[0].mxu0
    %v387 = vadd.f32 %v85, %v386
    %v388 = vpop.f32.mrb[0].mxu0
    %v389 = vpop.f32.mrb[0].mxu0
    %v390 = vadd.f32 %v85, %v389
    %v391 = vpop.f32.mrb[0].mxu0
    %392 = vmatprep.mubr.bf16.mxu0 0
    %393 = vmatmul.mubr.bf16.gmra.mrb[0].mxu0 %v244
    %v394 = vpop.f32.mrb[0].mxu0
    %v395 = vadd.f32 %v85, %v394
    %v396 = vpop.f32.mrb[0].mxu0
    %v397 = vpop.f32.mrb[0].mxu0
    %v398 = vadd.f32 %v85, %v397
    %v399 = vpop.f32.mrb[0].mxu0
    %400 = vmatprep.mubr.bf16.mxu0 0
    %401 = vmatmul.mubr.bf16.gmra.mrb[0].mxu0 %v247
    %v402 = vpop.f32.mrb[0].mxu0
    %v403 = vadd.f32 %v85, %v402
    %v404 = vpop.f32.mrb[0].mxu0
    %v405 = vpop.f32.mrb[0].mxu0
    %v406 = vadd.f32 %v85, %v405
    %v407 = vpop.f32.mrb[0].mxu0
    %408 = vmatprep.mubr.bf16.mxu0 0
    %409 = vmatmul.mubr.bf16.gmra.mrb[0].mxu0 %v250
    %v410 = vpop.f32.mrb[0].mxu0
    %v411 = vadd.f32 %v85, %v410
    %v412 = vpop.f32.mrb[0].mxu0
    %v413 = vpop.f32.mrb[0].mxu0
    %v414 = vadd.f32 %v85, %v413
    %v415 = vpop.f32.mrb[0].mxu0
    %416 = vmatprep.mubr.bf16.mxu0 0
    %417 = vmatmul.mubr.bf16.gmra.mrb[0].mxu0 %v253
    %v418 = vpop.f32.mrb[0].mxu0
    %v419 = vadd.f32 %v85, %v418
    %v420 = vpop.f32.mrb[0].mxu0
    %v421 = vpop.f32.mrb[0].mxu0
    %v422 = vadd.f32 %v85, %v421
    %v423 = vpop.f32.mrb[0].mxu0
    %424 = vmatprep.mubr.bf16.mxu0 0
    %425 = vmatmul.mubr.bf16.gmra.mrb[0].mxu0 %v256
    %v426 = vpop.f32.mrb[0].mxu0
    %v427 = vadd.f32 %v85, %v426
    %v428 = vpop.f32.mrb[0].mxu0
    %v429 = vpop.f32.mrb[0].mxu0
    %v430 = vadd.f32 %v85, %v429
    %v431 = vpop.f32.mrb[0].mxu0
    %432 = vmatprep.mubr.bf16.mxu0 0
    %433 = vmatmul.mubr.bf16.gmra.mrb[0].mxu0 %v259
    %v434 = vpop.f32.mrb[0].mxu0
    %v435 = vadd.f32 %v85, %v434
    %v436 = vpop.f32.mrb[0].mxu0
    %v437 = vpop.f32.mrb[0].mxu0
    %v438 = vadd.f32 %v85, %v437
    %v439 = vpop.f32.mrb[0].mxu0
    %440 = vmatprep.mubr.bf16.mxu0 0
    %441 = vmatmul.mubr.bf16.gmra.mrb[0].mxu0 %v262
    %v442 = vpop.f32.mrb[0].mxu0
    %v443 = vadd.f32 %v85, %v442
    %v444 = vpop.f32.mrb[0].mxu0
    %v445 = vpop.f32.mrb[0].mxu0
    %v446 = vadd.f32 %v85, %v445
    %v447 = vpop.f32.mrb[0].mxu0
    %448 = vdwg.mxu0
    %v449 = vmul.f32 %v299, 0.5
    %v450 = vmul.f32 %v302, 0.5
    %v451 = vmul.f32 %v307, 0.5
    %v452 = vmul.f32 %v310, 0.5
    %v453 = vmul.f32 %v315, 0.5
    %v454 = vmul.f32 %v318, 0.5
    %v455 = vmul.f32 %v323, 0.5
    %v456 = vmul.f32 %v326, 0.5
    %v457 = vmul.f32 %v331, 0.5
    %v458 = vmul.f32 %v334, 0.5
    %v459 = vmul.f32 %v339, 0.5
    %v460 = vmul.f32 %v342, 0.5
    %v461 = vmul.f32 %v347, 0.5
    %v462 = vmul.f32 %v350, 0.5
    %v463 = vmul.f32 %v355, 0.5
    %v464 = vmul.f32 %v358, 0.5
    %v465 = vmul.f32 %v363, 0.5
    %v466 = vmul.f32 %v366, 0.5
    %v467 = vmul.f32 %v371, 0.5
    %v468 = vmul.f32 %v374, 0.5
    %v469 = vmul.f32 %v379, 0.5
    %v470 = vmul.f32 %v382, 0.5
    %v471 = vmul.f32 %v387, 0.5
    %v472 = vmul.f32 %v390, 0.5
    %v473 = vmul.f32 %v395, 0.5
    %v474 = vmul.f32 %v398, 0.5
    %v475 = vmul.f32 %v403, 0.5
    %v476 = vmul.f32 %v406, 0.5
    %v477 = vmul.f32 %v411, 0.5
    %v478 = vmul.f32 %v414, 0.5
    %v479 = vmul.f32 %v419, 0.5
    %v480 = vmul.f32 %v422, 0.5
    %v481 = vmul.f32 %v427, 0.5
    %v482 = vmul.f32 %v430, 0.5
    %v483 = vmul.f32 %v435, 0.5
    %v484 = vmul.f32 %v438, 0.5
    %v485 = vmul.f32 %v443, 0.5
    %v486 = vmul.f32 %v446, 0.5
    %v487 = vtanh.pop %v449
    %v488 = vtanh.pop %v450
    %v489 = vtanh.pop %v451
    %v490 = vtanh.pop %v452
    %v491 = vtanh.pop %v453
    %v492 = vtanh.pop %v454
    %v493 = vtanh.pop %v455
    %v494 = vtanh.pop %v456
    %v495 = vtanh.pop %v457
    %v496 = vtanh.pop %v458
    %v497 = vtanh.pop %v459
    %v498 = vtanh.pop %v460
    %v499 = vtanh.pop %v461
    %v500 = vtanh.pop %v462
    %v501 = vtanh.pop %v463
    %v502 = vtanh.pop %v464
    %v503 = vtanh.pop %v465
    %v504 = vtanh.pop %v466
    %v505 = vtanh.pop %v467
    %v506 = vtanh.pop %v468
    %v507 = vtanh.pop %v469
    %v508 = vtanh.pop %v470
    %v509 = vtanh.pop %v471
    %v510 = vtanh.pop %v472
    %v511 = vtanh.pop %v473
    %v512 = vtanh.pop %v474
    %v513 = vtanh.pop %v475
    %v514 = vtanh.pop %v476
    %v515 = vtanh.pop %v477
    %v516 = vtanh.pop %v478
    %v517 = vtanh.pop %v479
    %v518 = vtanh.pop %v480
    %v519 = vtanh.pop %v481
    %v520 = vtanh.pop %v482
    %v521 = vtanh.pop %v483
    %v522 = vtanh.pop %v484
    %v523 = vtanh.pop %v485
    %v524 = vtanh.pop %v486
    %v525 = vmul.f32 %v487, 0.5
    %v526 = vmul.f32 %v488, 0.5
    %v527 = vmul.f32 %v489, 0.5
    %v528 = vmul.f32 %v490, 0.5
    %v529 = vmul.f32 %v491, 0.5
    %v530 = vmul.f32 %v492, 0.5
    %v531 = vmul.f32 %v493, 0.5
    %v532 = vmul.f32 %v494, 0.5
    %v533 = vmul.f32 %v495, 0.5
    %v534 = vmul.f32 %v496, 0.5
    %v535 = vmul.f32 %v497, 0.5
    %v536 = vmul.f32 %v498, 0.5
    %v537 = vmul.f32 %v499, 0.5
    %v538 = vmul.f32 %v500, 0.5
    %v539 = vmul.f32 %v501, 0.5
    %v540 = vmul.f32 %v502, 0.5
    %v541 = vmul.f32 %v503, 0.5
    %v542 = vmul.f32 %v504, 0.5
    %v543 = vmul.f32 %v505, 0.5
    %v544 = vmul.f32 %v506, 0.5
    %v545 = vmul.f32 %v507, 0.5
    %v546 = vmul.f32 %v508, 0.5
    %v547 = vmul.f32 %v509, 0.5
    %v548 = vmul.f32 %v510, 0.5
    %v549 = vmul.f32 %v511, 0.5
    %v550 = vmul.f32 %v512, 0.5
    %v551 = vmul.f32 %v513, 0.5
    %v552 = vmul.f32 %v514, 0.5
    %v553 = vmul.f32 %v515, 0.5
    %v554 = vmul.f32 %v516, 0.5
    %v555 = vmul.f32 %v517, 0.5
    %v556 = vmul.f32 %v518, 0.5
    %v557 = vmul.f32 %v519, 0.5
    %v558 = vmul.f32 %v520, 0.5
    %v559 = vmul.f32 %v521, 0.5
    %v560 = vmul.f32 %v522, 0.5
    %v561 = vmul.f32 %v523, 0.5
    %v562 = vmul.f32 %v524, 0.5
    %v563 = vadd.f32 %v525, 0.5
    %v564 = vadd.f32 %v526, 0.5
    %v565 = vadd.f32 %v527, 0.5
    %v566 = vadd.f32 %v528, 0.5
    %v567 = vadd.f32 %v529, 0.5
    %v568 = vadd.f32 %v530, 0.5
    %v569 = vadd.f32 %v531, 0.5
    %v570 = vadd.f32 %v532, 0.5
    %v571 = vadd.f32 %v533, 0.5
    %v572 = vadd.f32 %v534, 0.5
    %v573 = vadd.f32 %v535, 0.5
    %v574 = vadd.f32 %v536, 0.5
    %v575 = vadd.f32 %v537, 0.5
    %v576 = vadd.f32 %v538, 0.5
    %v577 = vadd.f32 %v539, 0.5
    %v578 = vadd.f32 %v540, 0.5
    %v579 = vadd.f32 %v541, 0.5
    %v580 = vadd.f32 %v542, 0.5
    %v581 = vadd.f32 %v543, 0.5
    %v582 = vadd.f32 %v544, 0.5
    %v583 = vadd.f32 %v545, 0.5
    %v584 = vadd.f32 %v546, 0.5
    %v585 = vadd.f32 %v547, 0.5
    %v586 = vadd.f32 %v548, 0.5
    %v587 = vadd.f32 %v549, 0.5
    %v588 = vadd.f32 %v550, 0.5
    %v589 = vadd.f32 %v551, 0.5
    %v590 = vadd.f32 %v552, 0.5
    %v591 = vadd.f32 %v553, 0.5
    %v592 = vadd.f32 %v554, 0.5
    %v593 = vadd.f32 %v555, 0.5
    %v594 = vadd.f32 %v556, 0.5
    %v595 = vadd.f32 %v557, 0.5
    %v596 = vadd.f32 %v558, 0.5
    %v597 = vadd.f32 %v559, 0.5
    %v598 = vadd.f32 %v560, 0.5
    %v599 = vadd.f32 %v561, 0.5
    %v600 = vadd.f32 %v562, 0.5
    %v601 = vpack.c.bf16 %v564, %v563
    %v602 = vpack.c.bf16 %v566, %v565
    %v603 = vpack.c.bf16 %v568, %v567
    %v604 = vpack.c.bf16 %v570, %v569
    %v605 = vpack.c.bf16 %v572, %v571
    %v606 = vpack.c.bf16 %v574, %v573
    %v607 = vpack.c.bf16 %v576, %v575
    %v608 = vpack.c.bf16 %v578, %v577
    %v609 = vpack.c.bf16 %v580, %v579
    %v610 = vpack.c.bf16 %v582, %v581
    %v611 = vpack.c.bf16 %v584, %v583
    %v612 = vpack.c.bf16 %v586, %v585
    %v613 = vpack.c.bf16 %v588, %v587
    %v614 = vpack.c.bf16 %v590, %v589
    %v615 = vpack.c.bf16 %v592, %v591
    %v616 = vpack.c.bf16 %v594, %v593
    %v617 = vpack.c.bf16 %v596, %v595
    %v618 = vpack.c.bf16 %v598, %v597
    %v619 = vpack.c.bf16 %v600, %v599
    %v620 = vld [vmem:[%s3] sm:$0xf]
    %v621 = vld [vmem:[%s3 + $0x4] sm:$0xf]
    %v622 = vld [vmem:[%s3 + $0x8] sm:$0xf]
    %v623 = vld [vmem:[%s3 + $0xc] sm:$0xf]
    %v624 = vld [vmem:[%s3 + $0x10] sm:$0xf]
    %v625 = vld [vmem:[%s3 + $0x14] sm:$0xf]
    %v626 = vld [vmem:[%s3 + $0x18] sm:$0xf]
    %v627 = vld [vmem:[%s3 + $0x1c] sm:$0xf]
    %v628 = vld [vmem:[%s3 + $0x20] sm:$0xf]
    %v629 = vld [vmem:[%s3 + $0x24] sm:$0xf]
    %v630 = vld [vmem:[%s3 + $0x28] sm:$0xf]
    %v631 = vld [vmem:[%s3 + $0x2c] sm:$0xf]
    %v632 = vld [vmem:[%s3 + $0x30] sm:$0xf]
    %v633 = vld [vmem:[%s3 + $0x34] sm:$0xf]
    %v634 = vld [vmem:[%s3 + $0x38] sm:$0xf]
    %v635 = vld [vmem:[%s3 + $0x3c] sm:$0xf]
    %v636 = vld [vmem:[%s4] sm:$0x1]
    %v638 = vlaneseq
    %v639 = vshrl.u32 %v638, 7
    %v640 = vsub.s32 0, %v639
    %v641 = vrot.slane %v636, %v640
    %v659 = vunpack.c.l.b16 %v620
    %v660 = vunpack.c.l.b16 %v621
    %v661 = vunpack.c.l.b16 %v622
    %v662 = vunpack.c.l.b16 %v623
    %v663 = vunpack.c.l.b16 %v624
    %v664 = vunpack.c.l.b16 %v625
    %v665 = vunpack.c.l.b16 %v626
    %v666 = vunpack.c.l.b16 %v627
    %v667 = vunpack.c.l.b16 %v628
    %v668 = vunpack.c.l.b16 %v629
    %v669 = vunpack.c.l.b16 %v630
    %v670 = vunpack.c.l.b16 %v631
    %v671 = vunpack.c.l.b16 %v632
    %v672 = vunpack.c.l.b16 %v633
    %v673 = vunpack.c.l.b16 %v634
    %v674 = vunpack.c.l.b16 %v635
    %v675 = vpack.c.b16 %v660, %v659
    %v676 = vpack.c.b16 %v662, %v661
    %v677 = vpack.c.b16 %v664, %v663
    %v678 = vpack.c.b16 %v666, %v665
    %v679 = vpack.c.b16 %v668, %v667
    %v680 = vpack.c.b16 %v670, %v669
    %v681 = vpack.c.b16 %v672, %v671
    %v682 = vpack.c.b16 %v674, %v673
    %691 = vmatprep.subr.bf16.mxu0 0
    %692 = vmatpush1.bf16.msra.mxu0 %v675
    %693 = vmatprep.subr.bf16.mxu0 0
    %694 = vmatpush1.bf16.msra.mxu0 %v676
    %695 = vmatprep.subr.bf16.mxu0 0
    %696 = vmatpush1.bf16.msra.mxu0 %v677
    %697 = vmatprep.subr.bf16.mxu0 0
    %698 = vmatpush1.bf16.msra.mxu0 %v678
    %699 = vmatprep.subr.bf16.mxu0 0
    %700 = vmatpush1.bf16.msra.mxu0 %v679
    %701 = vmatprep.subr.bf16.mxu0 0
    %702 = vmatpush1.bf16.msra.mxu0 %v680
    %703 = vmatprep.subr.bf16.mxu0 0
    %704 = vmatpush1.bf16.msra.mxu0 %v681
    %705 = vmatprep.subr.bf16.mxu0 0
    %706 = vmatpush1.bf16.msra.mxu0 %v682
    %707 = vmatprep.subr.bf16.mxu0 0
    %708 = vmatpush1.bf16.msra.mxu0 0
    %709 = vmatprep.subr.bf16.mxu0 0
    %710 = vmatpush1.bf16.msra.mxu0 0
    %711 = vmatprep.subr.bf16.mxu0 0
    %712 = vmatpush1.bf16.msra.mxu0 0
    %713 = vmatprep.subr.bf16.mxu0 0
    %714 = vmatpush1.bf16.msra.mxu0 0
    %715 = vmatprep.subr.bf16.mxu0 0
    %716 = vmatpush1.bf16.msra.mxu0 0
    %717 = vmatprep.subr.bf16.mxu0 0
    %718 = vmatpush1.bf16.msra.mxu0 0
    %719 = vmatprep.subr.bf16.mxu0 0
    %720 = vmatpush1.bf16.msra.mxu0 0
    %721 = vmatprep.subr.bf16.mxu0 0
    %722 = vmatpush1.bf16.msra.mxu0 0
    %723 = vmatprep.mubr.bf16.mxu0 0
    %724 = vmatmul.mubr.bf16.gmra.mrb[0].mxu0 %v601
    %v725 = vpop.f32.mrb[0].mxu0
    %v726 = vadd.f32 %v641, %v725
    %v727 = vpop.f32.mrb[0].mxu0
    %v728 = vpop.f32.mrb[0].mxu0
    %v729 = vadd.f32 %v641, %v728
    %v730 = vpop.f32.mrb[0].mxu0
    %731 = vmatprep.mubr.bf16.mxu0 0
    %732 = vmatmul.mubr.bf16.gmra.mrb[0].mxu0 %v602
    %v733 = vpop.f32.mrb[0].mxu0
    %v734 = vadd.f32 %v641, %v733
    %v735 = vpop.f32.mrb[0].mxu0
    %v736 = vpop.f32.mrb[0].mxu0
    %v737 = vadd.f32 %v641, %v736
    %v738 = vpop.f32.mrb[0].mxu0
    %739 = vmatprep.mubr.bf16.mxu0 0
    %740 = vmatmul.mubr.bf16.gmra.mrb[0].mxu0 %v603
    %v741 = vpop.f32.mrb[0].mxu0
    %v742 = vadd.f32 %v641, %v741
    %v743 = vpop.f32.mrb[0].mxu0
    %v744 = vpop.f32.mrb[0].mxu0
    %v745 = vadd.f32 %v641, %v744
    %v746 = vpop.f32.mrb[0].mxu0
    %747 = vmatprep.mubr.bf16.mxu0 0
    %748 = vmatmul.mubr.bf16.gmra.mrb[0].mxu0 %v604
    %v749 = vpop.f32.mrb[0].mxu0
    %v750 = vadd.f32 %v641, %v749
    %v751 = vpop.f32.mrb[0].mxu0
    %v752 = vpop.f32.mrb[0].mxu0
    %v753 = vadd.f32 %v641, %v752
    %v754 = vpop.f32.mrb[0].mxu0
    %755 = vmatprep.mubr.bf16.mxu0 0
    %756 = vmatmul.mubr.bf16.gmra.mrb[0].mxu0 %v605
    %v757 = vpop.f32.mrb[0].mxu0
    %v758 = vadd.f32 %v641, %v757
    %v759 = vpop.f32.mrb[0].mxu0
    %v760 = vpop.f32.mrb[0].mxu0
    %v761 = vadd.f32 %v641, %v760
    %v762 = vpop.f32.mrb[0].mxu0
    %763 = vmatprep.mubr.bf16.mxu0 0
    %764 = vmatmul.mubr.bf16.gmra.mrb[0].mxu0 %v606
    %v765 = vpop.f32.mrb[0].mxu0
    %v766 = vadd.f32 %v641, %v765
    %v767 = vpop.f32.mrb[0].mxu0
    %v768 = vpop.f32.mrb[0].mxu0
    %v769 = vadd.f32 %v641, %v768
    %v770 = vpop.f32.mrb[0].mxu0
    %771 = vmatprep.mubr.bf16.mxu0 0
    %772 = vmatmul.mubr.bf16.gmra.mrb[0].mxu0 %v607
    %v773 = vpop.f32.mrb[0].mxu0
    %v774 = vadd.f32 %v641, %v773
    %v775 = vpop.f32.mrb[0].mxu0
    %v776 = vpop.f32.mrb[0].mxu0
    %v777 = vadd.f32 %v641, %v776
    %v778 = vpop.f32.mrb[0].mxu0
    %779 = vmatprep.mubr.bf16.mxu0 0
    %780 = vmatmul.mubr.bf16.gmra.mrb[0].mxu0 %v608
    %v781 = vpop.f32.mrb[0].mxu0
    %v782 = vadd.f32 %v641, %v781
    %v783 = vpop.f32.mrb[0].mxu0
    %v784 = vpop.f32.mrb[0].mxu0
    %v785 = vadd.f32 %v641, %v784
    %v786 = vpop.f32.mrb[0].mxu0
    %787 = vmatprep.mubr.bf16.mxu0 0
    %788 = vmatmul.mubr.bf16.gmra.mrb[0].mxu0 %v609
    %v789 = vpop.f32.mrb[0].mxu0
    %v790 = vadd.f32 %v641, %v789
    %v791 = vpop.f32.mrb[0].mxu0
    %v792 = vpop.f32.mrb[0].mxu0
    %v793 = vadd.f32 %v641, %v792
    %v794 = vpop.f32.mrb[0].mxu0
    %795 = vmatprep.mubr.bf16.mxu0 0
    %796 = vmatmul.mubr.bf16.gmra.mrb[0].mxu0 %v610
    %v797 = vpop.f32.mrb[0].mxu0
    %v798 = vadd.f32 %v641, %v797
    %v799 = vpop.f32.mrb[0].mxu0
    %v800 = vpop.f32.mrb[0].mxu0
    %v801 = vadd.f32 %v641, %v800
    %v802 = vpop.f32.mrb[0].mxu0
    %803 = vmatprep.mubr.bf16.mxu0 0
    %804 = vmatmul.mubr.bf16.gmra.mrb[0].mxu0 %v611
    %v805 = vpop.f32.mrb[0].mxu0
    %v806 = vadd.f32 %v641, %v805
    %v807 = vpop.f32.mrb[0].mxu0
    %v808 = vpop.f32.mrb[0].mxu0
    %v809 = vadd.f32 %v641, %v808
    %v810 = vpop.f32.mrb[0].mxu0
    %811 = vmatprep.mubr.bf16.mxu0 0
    %812 = vmatmul.mubr.bf16.gmra.mrb[0].mxu0 %v612
    %v813 = vpop.f32.mrb[0].mxu0
    %v814 = vadd.f32 %v641, %v813
    %v815 = vpop.f32.mrb[0].mxu0
    %v816 = vpop.f32.mrb[0].mxu0
    %v817 = vadd.f32 %v641, %v816
    %v818 = vpop.f32.mrb[0].mxu0
    %819 = vmatprep.mubr.bf16.mxu0 0
    %820 = vmatmul.mubr.bf16.gmra.mrb[0].mxu0 %v613
    %v821 = vpop.f32.mrb[0].mxu0
    %v822 = vadd.f32 %v641, %v821
    %v823 = vpop.f32.mrb[0].mxu0
    %v824 = vpop.f32.mrb[0].mxu0
    %v825 = vadd.f32 %v641, %v824
    %v826 = vpop.f32.mrb[0].mxu0
    %827 = vmatprep.mubr.bf16.mxu0 0
    %828 = vmatmul.mubr.bf16.gmra.mrb[0].mxu0 %v614
    %v829 = vpop.f32.mrb[0].mxu0
    %v830 = vadd.f32 %v641, %v829
    %v831 = vpop.f32.mrb[0].mxu0
    %v832 = vpop.f32.mrb[0].mxu0
    %v833 = vadd.f32 %v641, %v832
    %v834 = vpop.f32.mrb[0].mxu0
    %835 = vmatprep.mubr.bf16.mxu0 0
    %836 = vmatmul.mubr.bf16.gmra.mrb[0].mxu0 %v615
    %v837 = vpop.f32.mrb[0].mxu0
    %v838 = vadd.f32 %v641, %v837
    %v839 = vpop.f32.mrb[0].mxu0
    %v840 = vpop.f32.mrb[0].mxu0
    %v841 = vadd.f32 %v641, %v840
    %v842 = vpop.f32.mrb[0].mxu0
    %843 = vmatprep.mubr.bf16.mxu0 0
    %844 = vmatmul.mubr.bf16.gmra.mrb[0].mxu0 %v616
    %v845 = vpop.f32.mrb[0].mxu0
    %v846 = vadd.f32 %v641, %v845
    %v847 = vpop.f32.mrb[0].mxu0
    %v848 = vpop.f32.mrb[0].mxu0
    %v849 = vadd.f32 %v641, %v848
    %v850 = vpop.f32.mrb[0].mxu0
    %851 = vmatprep.mubr.bf16.mxu0 0
    %852 = vmatmul.mubr.bf16.gmra.mrb[0].mxu0 %v617
    %v853 = vpop.f32.mrb[0].mxu0
    %v854 = vadd.f32 %v641, %v853
    %v855 = vpop.f32.mrb[0].mxu0
    %v856 = vpop.f32.mrb[0].mxu0
    %v857 = vadd.f32 %v641, %v856
    %v858 = vpop.f32.mrb[0].mxu0
    %859 = vmatprep.mubr.bf16.mxu0 0
    %860 = vmatmul.mubr.bf16.gmra.mrb[0].mxu0 %v618
    %v861 = vpop.f32.mrb[0].mxu0
    %v862 = vadd.f32 %v641, %v861
    %v863 = vpop.f32.mrb[0].mxu0
    %v864 = vpop.f32.mrb[0].mxu0
    %v865 = vadd.f32 %v641, %v864
    %v866 = vpop.f32.mrb[0].mxu0
    %867 = vmatprep.mubr.bf16.mxu0 0
    %868 = vmatmul.mubr.bf16.gmra.mrb[0].mxu0 %v619
    %v869 = vpop.f32.mrb[0].mxu0
    %v870 = vadd.f32 %v641, %v869
    %v871 = vpop.f32.mrb[0].mxu0
    %v872 = vpop.f32.mrb[0].mxu0
    %v873 = vadd.f32 %v641, %v872
    %v874 = vpop.f32.mrb[0].mxu0
    %875 = vdwg.mxu0
    %v876 = vmul.f32 %v726, 0.5
    %v877 = vmul.f32 %v729, 0.5
    %v878 = vmul.f32 %v734, 0.5
    %v879 = vmul.f32 %v737, 0.5
    %v880 = vmul.f32 %v742, 0.5
    %v881 = vmul.f32 %v745, 0.5
    %v882 = vmul.f32 %v750, 0.5
    %v883 = vmul.f32 %v753, 0.5
    %v884 = vmul.f32 %v758, 0.5
    %v885 = vmul.f32 %v761, 0.5
    %v886 = vmul.f32 %v766, 0.5
    %v887 = vmul.f32 %v769, 0.5
    %v888 = vmul.f32 %v774, 0.5
    %v889 = vmul.f32 %v777, 0.5
    %v890 = vmul.f32 %v782, 0.5
    %v891 = vmul.f32 %v785, 0.5
    %v892 = vmul.f32 %v790, 0.5
    %v893 = vmul.f32 %v793, 0.5
    %v894 = vmul.f32 %v798, 0.5
    %v895 = vmul.f32 %v801, 0.5
    %v896 = vmul.f32 %v806, 0.5
    %v897 = vmul.f32 %v809, 0.5
    %v898 = vmul.f32 %v814, 0.5
    %v899 = vmul.f32 %v817, 0.5
    %v900 = vmul.f32 %v822, 0.5
    %v901 = vmul.f32 %v825, 0.5
    %v902 = vmul.f32 %v830, 0.5
    %v903 = vmul.f32 %v833, 0.5
    %v904 = vmul.f32 %v838, 0.5
    %v905 = vmul.f32 %v841, 0.5
    %v906 = vmul.f32 %v846, 0.5
    %v907 = vmul.f32 %v849, 0.5
    %v908 = vmul.f32 %v854, 0.5
    %v909 = vmul.f32 %v857, 0.5
    %v910 = vmul.f32 %v862, 0.5
    %v911 = vmul.f32 %v865, 0.5
    %v912 = vmul.f32 %v870, 0.5
    %v913 = vmul.f32 %v873, 0.5
    %v914 = vtanh.pop %v876
    %v915 = vtanh.pop %v877
    %v916 = vtanh.pop %v878
    %v917 = vtanh.pop %v879
    %v918 = vtanh.pop %v880
    %v919 = vtanh.pop %v881
    %v920 = vtanh.pop %v882
    %v921 = vtanh.pop %v883
    %v922 = vtanh.pop %v884
    %v923 = vtanh.pop %v885
    %v924 = vtanh.pop %v886
    %v925 = vtanh.pop %v887
    %v926 = vtanh.pop %v888
    %v927 = vtanh.pop %v889
    %v928 = vtanh.pop %v890
    %v929 = vtanh.pop %v891
    %v930 = vtanh.pop %v892
    %v931 = vtanh.pop %v893
    %v932 = vtanh.pop %v894
    %v933 = vtanh.pop %v895
    %v934 = vtanh.pop %v896
    %v935 = vtanh.pop %v897
    %v936 = vtanh.pop %v898
    %v937 = vtanh.pop %v899
    %v938 = vtanh.pop %v900
    %v939 = vtanh.pop %v901
    %v940 = vtanh.pop %v902
    %v941 = vtanh.pop %v903
    %v942 = vtanh.pop %v904
    %v943 = vtanh.pop %v905
    %v944 = vtanh.pop %v906
    %v945 = vtanh.pop %v907
    %v946 = vtanh.pop %v908
    %v947 = vtanh.pop %v909
    %v948 = vtanh.pop %v910
    %v949 = vtanh.pop %v911
    %v950 = vtanh.pop %v912
    %v951 = vtanh.pop %v913
    %v952 = vmul.f32 %v914, 0.5
    %v953 = vmul.f32 %v915, 0.5
    %v954 = vmul.f32 %v916, 0.5
    %v955 = vmul.f32 %v917, 0.5
    %v956 = vmul.f32 %v918, 0.5
    %v957 = vmul.f32 %v919, 0.5
    %v958 = vmul.f32 %v920, 0.5
    %v959 = vmul.f32 %v921, 0.5
    %v960 = vmul.f32 %v922, 0.5
    %v961 = vmul.f32 %v923, 0.5
    %v962 = vmul.f32 %v924, 0.5
    %v963 = vmul.f32 %v925, 0.5
    %v964 = vmul.f32 %v926, 0.5
    %v965 = vmul.f32 %v927, 0.5
    %v966 = vmul.f32 %v928, 0.5
    %v967 = vmul.f32 %v929, 0.5
    %v968 = vmul.f32 %v930, 0.5
    %v969 = vmul.f32 %v931, 0.5
    %v970 = vmul.f32 %v932, 0.5
    %v971 = vmul.f32 %v933, 0.5
    %v972 = vmul.f32 %v934, 0.5
    %v973 = vmul.f32 %v935, 0.5
    %v974 = vmul.f32 %v936, 0.5
    %v975 = vmul.f32 %v937, 0.5
    %v976 = vmul.f32 %v938, 0.5
    %v977 = vmul.f32 %v939, 0.5
    %v978 = vmul.f32 %v940, 0.5
    %v979 = vmul.f32 %v941, 0.5
    %v980 = vmul.f32 %v942, 0.5
    %v981 = vmul.f32 %v943, 0.5
    %v982 = vmul.f32 %v944, 0.5
    %v983 = vmul.f32 %v945, 0.5
    %v984 = vmul.f32 %v946, 0.5
    %v985 = vmul.f32 %v947, 0.5
    %v986 = vmul.f32 %v948, 0.5
    %v987 = vmul.f32 %v949, 0.5
    %v988 = vmul.f32 %v950, 0.5
    %v989 = vmul.f32 %v951, 0.5
    %v990 = vadd.f32 %v952, 0.5
    %v991 = vadd.f32 %v953, 0.5
    %v992 = vadd.f32 %v954, 0.5
    %v993 = vadd.f32 %v955, 0.5
    %v994 = vadd.f32 %v956, 0.5
    %v995 = vadd.f32 %v957, 0.5
    %v996 = vadd.f32 %v958, 0.5
    %v997 = vadd.f32 %v959, 0.5
    %v998 = vadd.f32 %v960, 0.5
    %v999 = vadd.f32 %v961, 0.5
    %v1000 = vadd.f32 %v962, 0.5
    %v1001 = vadd.f32 %v963, 0.5
    %v1002 = vadd.f32 %v964, 0.5
    %v1003 = vadd.f32 %v965, 0.5
    %v1004 = vadd.f32 %v966, 0.5
    %v1005 = vadd.f32 %v967, 0.5
    %v1006 = vadd.f32 %v968, 0.5
    %v1007 = vadd.f32 %v969, 0.5
    %v1008 = vadd.f32 %v970, 0.5
    %v1009 = vadd.f32 %v971, 0.5
    %v1010 = vadd.f32 %v972, 0.5
    %v1011 = vadd.f32 %v973, 0.5
    %v1012 = vadd.f32 %v974, 0.5
    %v1013 = vadd.f32 %v975, 0.5
    %v1014 = vadd.f32 %v976, 0.5
    %v1015 = vadd.f32 %v977, 0.5
    %v1016 = vadd.f32 %v978, 0.5
    %v1017 = vadd.f32 %v979, 0.5
    %v1018 = vadd.f32 %v980, 0.5
    %v1019 = vadd.f32 %v981, 0.5
    %v1020 = vadd.f32 %v982, 0.5
    %v1021 = vadd.f32 %v983, 0.5
    %v1022 = vadd.f32 %v984, 0.5
    %v1023 = vadd.f32 %v985, 0.5
    %v1024 = vadd.f32 %v986, 0.5
    %v1025 = vadd.f32 %v987, 0.5
    %v1026 = vadd.f32 %v988, 0.5
    %v1027 = vadd.f32 %v989, 0.5
    %v1028 = vpack.c.bf16 %v991, %v990
    %v1029 = vpack.c.bf16 %v993, %v992
    %v1030 = vpack.c.bf16 %v995, %v994
    %v1031 = vpack.c.bf16 %v997, %v996
    %v1032 = vpack.c.bf16 %v999, %v998
    %v1033 = vpack.c.bf16 %v1001, %v1000
    %v1034 = vpack.c.bf16 %v1003, %v1002
    %v1035 = vpack.c.bf16 %v1005, %v1004
    %v1036 = vpack.c.bf16 %v1007, %v1006
    %v1037 = vpack.c.bf16 %v1009, %v1008
    %v1038 = vpack.c.bf16 %v1011, %v1010
    %v1039 = vpack.c.bf16 %v1013, %v1012
    %v1040 = vpack.c.bf16 %v1015, %v1014
    %v1041 = vpack.c.bf16 %v1017, %v1016
    %v1042 = vpack.c.bf16 %v1019, %v1018
    %v1043 = vpack.c.bf16 %v1021, %v1020
    %v1044 = vpack.c.bf16 %v1023, %v1022
    %v1045 = vpack.c.bf16 %v1025, %v1024
    %v1046 = vpack.c.bf16 %v1027, %v1026
    %v1047 = vld [vmem:[%s5] sm:$0xf]
    %v1048 = vld [vmem:[%s5 + $0x4] sm:$0xf]
    %v1049 = vld [vmem:[%s5 + $0x8] sm:$0xf]
    %v1050 = vld [vmem:[%s5 + $0xc] sm:$0xf]
    %v1051 = vld [vmem:[%s5 + $0x10] sm:$0xf]
    %v1052 = vld [vmem:[%s5 + $0x14] sm:$0xf]
    %v1053 = vld [vmem:[%s5 + $0x18] sm:$0xf]
    %v1054 = vld [vmem:[%s5 + $0x1c] sm:$0xf]
    %v1055 = vld [vmem:[%s5 + $0x20] sm:$0xf]
    %v1056 = vld [vmem:[%s5 + $0x24] sm:$0xf]
    %v1057 = vld [vmem:[%s5 + $0x28] sm:$0xf]
    %v1058 = vld [vmem:[%s5 + $0x2c] sm:$0xf]
    %v1059 = vld [vmem:[%s5 + $0x30] sm:$0xf]
    %v1060 = vld [vmem:[%s5 + $0x34] sm:$0xf]
    %v1061 = vld [vmem:[%s5 + $0x38] sm:$0xf]
    %v1062 = vld [vmem:[%s5 + $0x3c] sm:$0xf]
    %v1063 = vld [vmem:[%s6] sm:$0x1]
    %v1065 = vlaneseq
    %v1066 = vshrl.u32 %v1065, 7
    %v1067 = vsub.s32 0, %v1066
    %v1068 = vrot.slane %v1063, %v1067
    %v1086 = vunpack.c.l.b16 %v1047
    %v1087 = vunpack.c.l.b16 %v1048
    %v1088 = vunpack.c.l.b16 %v1049
    %v1089 = vunpack.c.l.b16 %v1050
    %v1090 = vunpack.c.l.b16 %v1051
    %v1091 = vunpack.c.l.b16 %v1052
    %v1092 = vunpack.c.l.b16 %v1053
    %v1093 = vunpack.c.l.b16 %v1054
    %v1094 = vunpack.c.l.b16 %v1055
    %v1095 = vunpack.c.l.b16 %v1056
    %v1096 = vunpack.c.l.b16 %v1057
    %v1097 = vunpack.c.l.b16 %v1058
    %v1098 = vunpack.c.l.b16 %v1059
    %v1099 = vunpack.c.l.b16 %v1060
    %v1100 = vunpack.c.l.b16 %v1061
    %v1101 = vunpack.c.l.b16 %v1062
    %v1102 = vpack.c.b16 %v1087, %v1086
    %v1103 = vpack.c.b16 %v1089, %v1088
    %v1104 = vpack.c.b16 %v1091, %v1090
    %v1105 = vpack.c.b16 %v1093, %v1092
    %v1106 = vpack.c.b16 %v1095, %v1094
    %v1107 = vpack.c.b16 %v1097, %v1096
    %v1108 = vpack.c.b16 %v1099, %v1098
    %v1109 = vpack.c.b16 %v1101, %v1100
    %1118 = vmatprep.subr.bf16.mxu0 0
    %1119 = vmatpush1.bf16.msra.mxu0 %v1102
    %1120 = vmatprep.subr.bf16.mxu0 0
    %1121 = vmatpush1.bf16.msra.mxu0 %v1103
    %1122 = vmatprep.subr.bf16.mxu0 0
    %1123 = vmatpush1.bf16.msra.mxu0 %v1104
    %1124 = vmatprep.subr.bf16.mxu0 0
    %1125 = vmatpush1.bf16.msra.mxu0 %v1105
    %1126 = vmatprep.subr.bf16.mxu0 0
    %1127 = vmatpush1.bf16.msra.mxu0 %v1106
    %1128 = vmatprep.subr.bf16.mxu0 0
    %1129 = vmatpush1.bf16.msra.mxu0 %v1107
    %1130 = vmatprep.subr.bf16.mxu0 0
    %1131 = vmatpush1.bf16.msra.mxu0 %v1108
    %1132 = vmatprep.subr.bf16.mxu0 0
    %1133 = vmatpush1.bf16.msra.mxu0 %v1109
    %1134 = vmatprep.subr.bf16.mxu0 0
    %1135 = vmatpush1.bf16.msra.mxu0 0
    %1136 = vmatprep.subr.bf16.mxu0 0
    %1137 = vmatpush1.bf16.msra.mxu0 0
    %1138 = vmatprep.subr.bf16.mxu0 0
    %1139 = vmatpush1.bf16.msra.mxu0 0
    %1140 = vmatprep.subr.bf16.mxu0 0
    %1141 = vmatpush1.bf16.msra.mxu0 0
    %1142 = vmatprep.subr.bf16.mxu0 0
    %1143 = vmatpush1.bf16.msra.mxu0 0
    %1144 = vmatprep.subr.bf16.mxu0 0
    %1145 = vmatpush1.bf16.msra.mxu0 0
    %1146 = vmatprep.subr.bf16.mxu0 0
    %1147 = vmatpush1.bf16.msra.mxu0 0
    %1148 = vmatprep.subr.bf16.mxu0 0
    %1149 = vmatpush1.bf16.msra.mxu0 0
    %1150 = vmatprep.mubr.bf16.mxu0 0
    %1151 = vmatmul.mubr.bf16.gmra.mrb[0].mxu0 %v1028
    %v1152 = vpop.f32.mrb[0].mxu0
    %v1153 = vadd.f32 %v1068, %v1152
    %v1154 = vpop.f32.mrb[0].mxu0
    %v1155 = vpop.f32.mrb[0].mxu0
    %v1156 = vadd.f32 %v1068, %v1155
    %v1157 = vpop.f32.mrb[0].mxu0
    %1158 = vmatprep.mubr.bf16.mxu0 0
    %1159 = vmatmul.mubr.bf16.gmra.mrb[0].mxu0 %v1029
    %v1160 = vpop.f32.mrb[0].mxu0
    %v1161 = vadd.f32 %v1068, %v1160
    %v1162 = vpop.f32.mrb[0].mxu0
    %v1163 = vpop.f32.mrb[0].mxu0
    %v1164 = vadd.f32 %v1068, %v1163
    %v1165 = vpop.f32.mrb[0].mxu0
    %1166 = vmatprep.mubr.bf16.mxu0 0
    %1167 = vmatmul.mubr.bf16.gmra.mrb[0].mxu0 %v1030
    %v1168 = vpop.f32.mrb[0].mxu0
    %v1169 = vadd.f32 %v1068, %v1168
    %v1170 = vpop.f32.mrb[0].mxu0
    %v1171 = vpop.f32.mrb[0].mxu0
    %v1172 = vadd.f32 %v1068, %v1171
    %v1173 = vpop.f32.mrb[0].mxu0
    %1174 = vmatprep.mubr.bf16.mxu0 0
    %1175 = vmatmul.mubr.bf16.gmra.mrb[0].mxu0 %v1031
    %v1176 = vpop.f32.mrb[0].mxu0
    %v1177 = vadd.f32 %v1068, %v1176
    %v1178 = vpop.f32.mrb[0].mxu0
    %v1179 = vpop.f32.mrb[0].mxu0
    %v1180 = vadd.f32 %v1068, %v1179
    %v1181 = vpop.f32.mrb[0].mxu0
    %1182 = vmatprep.mubr.bf16.mxu0 0
    %1183 = vmatmul.mubr.bf16.gmra.mrb[0].mxu0 %v1032
    %v1184 = vpop.f32.mrb[0].mxu0
    %v1185 = vadd.f32 %v1068, %v1184
    %v1186 = vpop.f32.mrb[0].mxu0
    %v1187 = vpop.f32.mrb[0].mxu0
    %v1188 = vadd.f32 %v1068, %v1187
    %v1189 = vpop.f32.mrb[0].mxu0
    %1190 = vmatprep.mubr.bf16.mxu0 0
    %1191 = vmatmul.mubr.bf16.gmra.mrb[0].mxu0 %v1033
    %v1192 = vpop.f32.mrb[0].mxu0
    %v1193 = vadd.f32 %v1068, %v1192
    %v1194 = vpop.f32.mrb[0].mxu0
    %v1195 = vpop.f32.mrb[0].mxu0
    %v1196 = vadd.f32 %v1068, %v1195
    %v1197 = vpop.f32.mrb[0].mxu0
    %1198 = vmatprep.mubr.bf16.mxu0 0
    %1199 = vmatmul.mubr.bf16.gmra.mrb[0].mxu0 %v1034
    %v1200 = vpop.f32.mrb[0].mxu0
    %v1201 = vadd.f32 %v1068, %v1200
    %v1202 = vpop.f32.mrb[0].mxu0
    %v1203 = vpop.f32.mrb[0].mxu0
    %v1204 = vadd.f32 %v1068, %v1203
    %v1205 = vpop.f32.mrb[0].mxu0
    %1206 = vmatprep.mubr.bf16.mxu0 0
    %1207 = vmatmul.mubr.bf16.gmra.mrb[0].mxu0 %v1035
    %v1208 = vpop.f32.mrb[0].mxu0
    %v1209 = vadd.f32 %v1068, %v1208
    %v1210 = vpop.f32.mrb[0].mxu0
    %v1211 = vpop.f32.mrb[0].mxu0
    %v1212 = vadd.f32 %v1068, %v1211
    %v1213 = vpop.f32.mrb[0].mxu0
    %1214 = vmatprep.mubr.bf16.mxu0 0
    %1215 = vmatmul.mubr.bf16.gmra.mrb[0].mxu0 %v1036
    %v1216 = vpop.f32.mrb[0].mxu0
    %v1217 = vadd.f32 %v1068, %v1216
    %v1218 = vpop.f32.mrb[0].mxu0
    %v1219 = vpop.f32.mrb[0].mxu0
    %v1220 = vadd.f32 %v1068, %v1219
    %v1221 = vpop.f32.mrb[0].mxu0
    %1222 = vmatprep.mubr.bf16.mxu0 0
    %1223 = vmatmul.mubr.bf16.gmra.mrb[0].mxu0 %v1037
    %v1224 = vpop.f32.mrb[0].mxu0
    %v1225 = vadd.f32 %v1068, %v1224
    %v1226 = vpop.f32.mrb[0].mxu0
    %v1227 = vpop.f32.mrb[0].mxu0
    %v1228 = vadd.f32 %v1068, %v1227
    %v1229 = vpop.f32.mrb[0].mxu0
    %1230 = vmatprep.mubr.bf16.mxu0 0
    %1231 = vmatmul.mubr.bf16.gmra.mrb[0].mxu0 %v1038
    %v1232 = vpop.f32.mrb[0].mxu0
    %v1233 = vadd.f32 %v1068, %v1232
    %v1234 = vpop.f32.mrb[0].mxu0
    %v1235 = vpop.f32.mrb[0].mxu0
    %v1236 = vadd.f32 %v1068, %v1235
    %v1237 = vpop.f32.mrb[0].mxu0
    %1238 = vmatprep.mubr.bf16.mxu0 0
    %1239 = vmatmul.mubr.bf16.gmra.mrb[0].mxu0 %v1039
    %v1240 = vpop.f32.mrb[0].mxu0
    %v1241 = vadd.f32 %v1068, %v1240
    %v1242 = vpop.f32.mrb[0].mxu0
    %v1243 = vpop.f32.mrb[0].mxu0
    %v1244 = vadd.f32 %v1068, %v1243
    %v1245 = vpop.f32.mrb[0].mxu0
    %1246 = vmatprep.mubr.bf16.mxu0 0
    %1247 = vmatmul.mubr.bf16.gmra.mrb[0].mxu0 %v1040
    %v1248 = vpop.f32.mrb[0].mxu0
    %v1249 = vadd.f32 %v1068, %v1248
    %v1250 = vpop.f32.mrb[0].mxu0
    %v1251 = vpop.f32.mrb[0].mxu0
    %v1252 = vadd.f32 %v1068, %v1251
    %v1253 = vpop.f32.mrb[0].mxu0
    %1254 = vmatprep.mubr.bf16.mxu0 0
    %1255 = vmatmul.mubr.bf16.gmra.mrb[0].mxu0 %v1041
    %v1256 = vpop.f32.mrb[0].mxu0
    %v1257 = vadd.f32 %v1068, %v1256
    %v1258 = vpop.f32.mrb[0].mxu0
    %v1259 = vpop.f32.mrb[0].mxu0
    %v1260 = vadd.f32 %v1068, %v1259
    %v1261 = vpop.f32.mrb[0].mxu0
    %1262 = vmatprep.mubr.bf16.mxu0 0
    %1263 = vmatmul.mubr.bf16.gmra.mrb[0].mxu0 %v1042
    %v1264 = vpop.f32.mrb[0].mxu0
    %v1265 = vadd.f32 %v1068, %v1264
    %v1266 = vpop.f32.mrb[0].mxu0
    %v1267 = vpop.f32.mrb[0].mxu0
    %v1268 = vadd.f32 %v1068, %v1267
    %v1269 = vpop.f32.mrb[0].mxu0
    %1270 = vmatprep.mubr.bf16.mxu0 0
    %1271 = vmatmul.mubr.bf16.gmra.mrb[0].mxu0 %v1043
    %v1272 = vpop.f32.mrb[0].mxu0
    %v1273 = vadd.f32 %v1068, %v1272
    %v1274 = vpop.f32.mrb[0].mxu0
    %v1275 = vpop.f32.mrb[0].mxu0
    %v1276 = vadd.f32 %v1068, %v1275
    %v1277 = vpop.f32.mrb[0].mxu0
    %1278 = vmatprep.mubr.bf16.mxu0 0
    %1279 = vmatmul.mubr.bf16.gmra.mrb[0].mxu0 %v1044
    %v1280 = vpop.f32.mrb[0].mxu0
    %v1281 = vadd.f32 %v1068, %v1280
    %v1282 = vpop.f32.mrb[0].mxu0
    %v1283 = vpop.f32.mrb[0].mxu0
    %v1284 = vadd.f32 %v1068, %v1283
    %v1285 = vpop.f32.mrb[0].mxu0
    %1286 = vmatprep.mubr.bf16.mxu0 0
    %1287 = vmatmul.mubr.bf16.gmra.mrb[0].mxu0 %v1045
    %v1288 = vpop.f32.mrb[0].mxu0
    %v1289 = vadd.f32 %v1068, %v1288
    %v1290 = vpop.f32.mrb[0].mxu0
    %v1291 = vpop.f32.mrb[0].mxu0
    %v1292 = vadd.f32 %v1068, %v1291
    %v1293 = vpop.f32.mrb[0].mxu0
    %1294 = vmatprep.mubr.bf16.mxu0 0
    %1295 = vmatmul.mubr.bf16.gmra.mrb[0].mxu0 %v1046
    %v1296 = vpop.f32.mrb[0].mxu0
    %v1297 = vadd.f32 %v1068, %v1296
    %v1298 = vpop.f32.mrb[0].mxu0
    %v1299 = vpop.f32.mrb[0].mxu0
    %v1300 = vadd.f32 %v1068, %v1299
    %v1301 = vpop.f32.mrb[0].mxu0
    %1302 = vdwg.mxu0
    %v1303 = vmul.f32 %v1153, 0.5
    %v1304 = vmul.f32 %v1156, 0.5
    %v1305 = vmul.f32 %v1161, 0.5
    %v1306 = vmul.f32 %v1164, 0.5
    %v1307 = vmul.f32 %v1169, 0.5
    %v1308 = vmul.f32 %v1172, 0.5
    %v1309 = vmul.f32 %v1177, 0.5
    %v1310 = vmul.f32 %v1180, 0.5
    %v1311 = vmul.f32 %v1185, 0.5
    %v1312 = vmul.f32 %v1188, 0.5
    %v1313 = vmul.f32 %v1193, 0.5
    %v1314 = vmul.f32 %v1196, 0.5
    %v1315 = vmul.f32 %v1201, 0.5
    %v1316 = vmul.f32 %v1204, 0.5
    %v1317 = vmul.f32 %v1209, 0.5
    %v1318 = vmul.f32 %v1212, 0.5
    %v1319 = vmul.f32 %v1217, 0.5
    %v1320 = vmul.f32 %v1220, 0.5
    %v1321 = vmul.f32 %v1225, 0.5
    %v1322 = vmul.f32 %v1228, 0.5
    %v1323 = vmul.f32 %v1233, 0.5
    %v1324 = vmul.f32 %v1236, 0.5
    %v1325 = vmul.f32 %v1241, 0.5
    %v1326 = vmul.f32 %v1244, 0.5
    %v1327 = vmul.f32 %v1249, 0.5
    %v1328 = vmul.f32 %v1252, 0.5
    %v1329 = vmul.f32 %v1257, 0.5
    %v1330 = vmul.f32 %v1260, 0.5
    %v1331 = vmul.f32 %v1265, 0.5
    %v1332 = vmul.f32 %v1268, 0.5
    %v1333 = vmul.f32 %v1273, 0.5
    %v1334 = vmul.f32 %v1276, 0.5
    %v1335 = vmul.f32 %v1281, 0.5
    %v1336 = vmul.f32 %v1284, 0.5
    %v1337 = vmul.f32 %v1289, 0.5
    %v1338 = vmul.f32 %v1292, 0.5
    %v1339 = vmul.f32 %v1297, 0.5
    %v1340 = vmul.f32 %v1300, 0.5
    %v1341 = vtanh.pop %v1303
    %v1342 = vtanh.pop %v1304
    %v1343 = vtanh.pop %v1305
    %v1344 = vtanh.pop %v1306
    %v1345 = vtanh.pop %v1307
    %v1346 = vtanh.pop %v1308
    %v1347 = vtanh.pop %v1309
    %v1348 = vtanh.pop %v1310
    %v1349 = vtanh.pop %v1311
    %v1350 = vtanh.pop %v1312
    %v1351 = vtanh.pop %v1313
    %v1352 = vtanh.pop %v1314
    %v1353 = vtanh.pop %v1315
    %v1354 = vtanh.pop %v1316
    %v1355 = vtanh.pop %v1317
    %v1356 = vtanh.pop %v1318
    %v1357 = vtanh.pop %v1319
    %v1358 = vtanh.pop %v1320
    %v1359 = vtanh.pop %v1321
    %v1360 = vtanh.pop %v1322
    %v1361 = vtanh.pop %v1323
    %v1362 = vtanh.pop %v1324
    %v1363 = vtanh.pop %v1325
    %v1364 = vtanh.pop %v1326
    %v1365 = vtanh.pop %v1327
    %v1366 = vtanh.pop %v1328
    %v1367 = vtanh.pop %v1329
    %v1368 = vtanh.pop %v1330
    %v1369 = vtanh.pop %v1331
    %v1370 = vtanh.pop %v1332
    %v1371 = vtanh.pop %v1333
    %v1372 = vtanh.pop %v1334
    %v1373 = vtanh.pop %v1335
    %v1374 = vtanh.pop %v1336
    %v1375 = vtanh.pop %v1337
    %v1376 = vtanh.pop %v1338
    %v1377 = vtanh.pop %v1339
    %v1378 = vtanh.pop %v1340
    %v1379 = vmul.f32 %v1341, 0.5
    %v1380 = vmul.f32 %v1342, 0.5
    %v1381 = vmul.f32 %v1343, 0.5
    %v1382 = vmul.f32 %v1344, 0.5
    %v1383 = vmul.f32 %v1345, 0.5
    %v1384 = vmul.f32 %v1346, 0.5
    %v1385 = vmul.f32 %v1347, 0.5
    %v1386 = vmul.f32 %v1348, 0.5
    %v1387 = vmul.f32 %v1349, 0.5
    %v1388 = vmul.f32 %v1350, 0.5
    %v1389 = vmul.f32 %v1351, 0.5
    %v1390 = vmul.f32 %v1352, 0.5
    %v1391 = vmul.f32 %v1353, 0.5
    %v1392 = vmul.f32 %v1354, 0.5
    %v1393 = vmul.f32 %v1355, 0.5
    %v1394 = vmul.f32 %v1356, 0.5
    %v1395 = vmul.f32 %v1357, 0.5
    %v1396 = vmul.f32 %v1358, 0.5
    %v1397 = vmul.f32 %v1359, 0.5
    %v1398 = vmul.f32 %v1360, 0.5
    %v1399 = vmul.f32 %v1361, 0.5
    %v1400 = vmul.f32 %v1362, 0.5
    %v1401 = vmul.f32 %v1363, 0.5
    %v1402 = vmul.f32 %v1364, 0.5
    %v1403 = vmul.f32 %v1365, 0.5
    %v1404 = vmul.f32 %v1366, 0.5
    %v1405 = vmul.f32 %v1367, 0.5
    %v1406 = vmul.f32 %v1368, 0.5
    %v1407 = vmul.f32 %v1369, 0.5
    %v1408 = vmul.f32 %v1370, 0.5
    %v1409 = vmul.f32 %v1371, 0.5
    %v1410 = vmul.f32 %v1372, 0.5
    %v1411 = vmul.f32 %v1373, 0.5
    %v1412 = vmul.f32 %v1374, 0.5
    %v1413 = vmul.f32 %v1375, 0.5
    %v1414 = vmul.f32 %v1376, 0.5
    %v1415 = vmul.f32 %v1377, 0.5
    %v1416 = vmul.f32 %v1378, 0.5
    %v1417 = vadd.f32 %v1379, 0.5
    %v1418 = vadd.f32 %v1380, 0.5
    %v1419 = vadd.f32 %v1381, 0.5
    %v1420 = vadd.f32 %v1382, 0.5
    %v1421 = vadd.f32 %v1383, 0.5
    %v1422 = vadd.f32 %v1384, 0.5
    %v1423 = vadd.f32 %v1385, 0.5
    %v1424 = vadd.f32 %v1386, 0.5
    %v1425 = vadd.f32 %v1387, 0.5
    %v1426 = vadd.f32 %v1388, 0.5
    %v1427 = vadd.f32 %v1389, 0.5
    %v1428 = vadd.f32 %v1390, 0.5
    %v1429 = vadd.f32 %v1391, 0.5
    %v1430 = vadd.f32 %v1392, 0.5
    %v1431 = vadd.f32 %v1393, 0.5
    %v1432 = vadd.f32 %v1394, 0.5
    %v1433 = vadd.f32 %v1395, 0.5
    %v1434 = vadd.f32 %v1396, 0.5
    %v1435 = vadd.f32 %v1397, 0.5
    %v1436 = vadd.f32 %v1398, 0.5
    %v1437 = vadd.f32 %v1399, 0.5
    %v1438 = vadd.f32 %v1400, 0.5
    %v1439 = vadd.f32 %v1401, 0.5
    %v1440 = vadd.f32 %v1402, 0.5
    %v1441 = vadd.f32 %v1403, 0.5
    %v1442 = vadd.f32 %v1404, 0.5
    %v1443 = vadd.f32 %v1405, 0.5
    %v1444 = vadd.f32 %v1406, 0.5
    %v1445 = vadd.f32 %v1407, 0.5
    %v1446 = vadd.f32 %v1408, 0.5
    %v1447 = vadd.f32 %v1409, 0.5
    %v1448 = vadd.f32 %v1410, 0.5
    %v1449 = vadd.f32 %v1411, 0.5
    %v1450 = vadd.f32 %v1412, 0.5
    %v1451 = vadd.f32 %v1413, 0.5
    %v1452 = vadd.f32 %v1414, 0.5
    %v1453 = vadd.f32 %v1415, 0.5
    %v1454 = vadd.f32 %v1416, 0.5
    %v1455 = vpack.c.bf16 %v1418, %v1417
    %v1456 = vpack.c.bf16 %v1420, %v1419
    %v1457 = vpack.c.bf16 %v1422, %v1421
    %v1458 = vpack.c.bf16 %v1424, %v1423
    %v1459 = vpack.c.bf16 %v1426, %v1425
    %v1460 = vpack.c.bf16 %v1428, %v1427
    %v1461 = vpack.c.bf16 %v1430, %v1429
    %v1462 = vpack.c.bf16 %v1432, %v1431
    %v1463 = vpack.c.bf16 %v1434, %v1433
    %v1464 = vpack.c.bf16 %v1436, %v1435
    %v1465 = vpack.c.bf16 %v1438, %v1437
    %v1466 = vpack.c.bf16 %v1440, %v1439
    %v1467 = vpack.c.bf16 %v1442, %v1441
    %v1468 = vpack.c.bf16 %v1444, %v1443
    %v1469 = vpack.c.bf16 %v1446, %v1445
    %v1470 = vpack.c.bf16 %v1448, %v1447
    %v1471 = vpack.c.bf16 %v1450, %v1449
    %v1472 = vpack.c.bf16 %v1452, %v1451
    %v1473 = vpack.c.bf16 %v1454, %v1453
    %v1474 = vld [vmem:[%s7] sm:$0xf]
    %v1475 = vld [vmem:[%s7 + $0x4] sm:$0xf]
    %v1476 = vld [vmem:[%s7 + $0x8] sm:$0xf]
    %v1477 = vld [vmem:[%s7 + $0xc] sm:$0xf]
    %v1478 = vld [vmem:[%s7 + $0x10] sm:$0xf]
    %v1479 = vld [vmem:[%s7 + $0x14] sm:$0xf]
    %v1480 = vld [vmem:[%s7 + $0x18] sm:$0xf]
    %v1481 = vld [vmem:[%s7 + $0x1c] sm:$0xf]
    %v1482 = vld [vmem:[%s7 + $0x20] sm:$0xf]
    %v1483 = vld [vmem:[%s7 + $0x24] sm:$0xf]
    %v1484 = vld [vmem:[%s7 + $0x28] sm:$0xf]
    %v1485 = vld [vmem:[%s7 + $0x2c] sm:$0xf]
    %v1486 = vld [vmem:[%s7 + $0x30] sm:$0xf]
    %v1487 = vld [vmem:[%s7 + $0x34] sm:$0xf]
    %v1488 = vld [vmem:[%s7 + $0x38] sm:$0xf]
    %v1489 = vld [vmem:[%s7 + $0x3c] sm:$0xf]
    %v1490 = vld [vmem:[%s8] sm:$0x1]
    %v1492 = vlaneseq
    %v1493 = vshrl.u32 %v1492, 7
    %v1494 = vsub.s32 0, %v1493
    %v1495 = vrot.slane %v1490, %v1494
    %v1513 = vunpack.c.l.b16 %v1474
    %v1514 = vunpack.c.l.b16 %v1475
    %v1515 = vunpack.c.l.b16 %v1476
    %v1516 = vunpack.c.l.b16 %v1477
    %v1517 = vunpack.c.l.b16 %v1478
    %v1518 = vunpack.c.l.b16 %v1479
    %v1519 = vunpack.c.l.b16 %v1480
    %v1520 = vunpack.c.l.b16 %v1481
    %v1521 = vunpack.c.l.b16 %v1482
    %v1522 = vunpack.c.l.b16 %v1483
    %v1523 = vunpack.c.l.b16 %v1484
    %v1524 = vunpack.c.l.b16 %v1485
    %v1525 = vunpack.c.l.b16 %v1486
    %v1526 = vunpack.c.l.b16 %v1487
    %v1527 = vunpack.c.l.b16 %v1488
    %v1528 = vunpack.c.l.b16 %v1489
    %v1529 = vpack.c.b16 %v1514, %v1513
    %v1530 = vpack.c.b16 %v1516, %v1515
    %v1531 = vpack.c.b16 %v1518, %v1517
    %v1532 = vpack.c.b16 %v1520, %v1519
    %v1533 = vpack.c.b16 %v1522, %v1521
    %v1534 = vpack.c.b16 %v1524, %v1523
    %v1535 = vpack.c.b16 %v1526, %v1525
    %v1536 = vpack.c.b16 %v1528, %v1527
    %1545 = vmatprep.subr.bf16.mxu0 0
    %1546 = vmatpush1.bf16.msra.mxu0 %v1529
    %1547 = vmatprep.subr.bf16.mxu0 0
    %1548 = vmatpush1.bf16.msra.mxu0 %v1530
    %1549 = vmatprep.subr.bf16.mxu0 0
    %1550 = vmatpush1.bf16.msra.mxu0 %v1531
    %1551 = vmatprep.subr.bf16.mxu0 0
    %1552 = vmatpush1.bf16.msra.mxu0 %v1532
    %1553 = vmatprep.subr.bf16.mxu0 0
    %1554 = vmatpush1.bf16.msra.mxu0 %v1533
    %1555 = vmatprep.subr.bf16.mxu0 0
    %1556 = vmatpush1.bf16.msra.mxu0 %v1534
    %1557 = vmatprep.subr.bf16.mxu0 0
    %1558 = vmatpush1.bf16.msra.mxu0 %v1535
    %1559 = vmatprep.subr.bf16.mxu0 0
    %1560 = vmatpush1.bf16.msra.mxu0 %v1536
    %1561 = vmatprep.subr.bf16.mxu0 0
    %1562 = vmatpush1.bf16.msra.mxu0 0
    %1563 = vmatprep.subr.bf16.mxu0 0
    %1564 = vmatpush1.bf16.msra.mxu0 0
    %1565 = vmatprep.subr.bf16.mxu0 0
    %1566 = vmatpush1.bf16.msra.mxu0 0
    %1567 = vmatprep.subr.bf16.mxu0 0
    %1568 = vmatpush1.bf16.msra.mxu0 0
    %1569 = vmatprep.subr.bf16.mxu0 0
    %1570 = vmatpush1.bf16.msra.mxu0 0
    %1571 = vmatprep.subr.bf16.mxu0 0
    %1572 = vmatpush1.bf16.msra.mxu0 0
    %1573 = vmatprep.subr.bf16.mxu0 0
    %1574 = vmatpush1.bf16.msra.mxu0 0
    %1575 = vmatprep.subr.bf16.mxu0 0
    %1576 = vmatpush1.bf16.msra.mxu0 0
    %1577 = vmatprep.mubr.bf16.mxu0 0
    %1578 = vmatmul.mubr.bf16.gmra.mrb[0].mxu0 %v1455
    %v1579 = vpop.f32.mrb[0].mxu0
    %v1580 = vadd.f32 %v1495, %v1579
    %v1581 = vpop.f32.mrb[0].mxu0
    %v1582 = vpop.f32.mrb[0].mxu0
    %v1583 = vadd.f32 %v1495, %v1582
    %v1584 = vpop.f32.mrb[0].mxu0
    %1585 = vmatprep.mubr.bf16.mxu0 0
    %1586 = vmatmul.mubr.bf16.gmra.mrb[0].mxu0 %v1456
    %v1587 = vpop.f32.mrb[0].mxu0
    %v1588 = vadd.f32 %v1495, %v1587
    %v1589 = vpop.f32.mrb[0].mxu0
    %v1590 = vpop.f32.mrb[0].mxu0
    %v1591 = vadd.f32 %v1495, %v1590
    %v1592 = vpop.f32.mrb[0].mxu0
    %1593 = vmatprep.mubr.bf16.mxu0 0
    %1594 = vmatmul.mubr.bf16.gmra.mrb[0].mxu0 %v1457
    %v1595 = vpop.f32.mrb[0].mxu0
    %v1596 = vadd.f32 %v1495, %v1595
    %v1597 = vpop.f32.mrb[0].mxu0
    %v1598 = vpop.f32.mrb[0].mxu0
    %v1599 = vadd.f32 %v1495, %v1598
    %v1600 = vpop.f32.mrb[0].mxu0
    %1601 = vmatprep.mubr.bf16.mxu0 0
    %1602 = vmatmul.mubr.bf16.gmra.mrb[0].mxu0 %v1458
    %v1603 = vpop.f32.mrb[0].mxu0
    %v1604 = vadd.f32 %v1495, %v1603
    %v1605 = vpop.f32.mrb[0].mxu0
    %v1606 = vpop.f32.mrb[0].mxu0
    %v1607 = vadd.f32 %v1495, %v1606
    %v1608 = vpop.f32.mrb[0].mxu0
    %1609 = vmatprep.mubr.bf16.mxu0 0
    %1610 = vmatmul.mubr.bf16.gmra.mrb[0].mxu0 %v1459
    %v1611 = vpop.f32.mrb[0].mxu0
    %v1612 = vadd.f32 %v1495, %v1611
    %v1613 = vpop.f32.mrb[0].mxu0
    %v1614 = vpop.f32.mrb[0].mxu0
    %v1615 = vadd.f32 %v1495, %v1614
    %v1616 = vpop.f32.mrb[0].mxu0
    %1617 = vmatprep.mubr.bf16.mxu0 0
    %1618 = vmatmul.mubr.bf16.gmra.mrb[0].mxu0 %v1460
    %v1619 = vpop.f32.mrb[0].mxu0
    %v1620 = vadd.f32 %v1495, %v1619
    %v1621 = vpop.f32.mrb[0].mxu0
    %v1622 = vpop.f32.mrb[0].mxu0
    %v1623 = vadd.f32 %v1495, %v1622
    %v1624 = vpop.f32.mrb[0].mxu0
    %1625 = vmatprep.mubr.bf16.mxu0 0
    %1626 = vmatmul.mubr.bf16.gmra.mrb[0].mxu0 %v1461
    %v1627 = vpop.f32.mrb[0].mxu0
    %v1628 = vadd.f32 %v1495, %v1627
    %v1629 = vpop.f32.mrb[0].mxu0
    %v1630 = vpop.f32.mrb[0].mxu0
    %v1631 = vadd.f32 %v1495, %v1630
    %v1632 = vpop.f32.mrb[0].mxu0
    %1633 = vmatprep.mubr.bf16.mxu0 0
    %1634 = vmatmul.mubr.bf16.gmra.mrb[0].mxu0 %v1462
    %v1635 = vpop.f32.mrb[0].mxu0
    %v1636 = vadd.f32 %v1495, %v1635
    %v1637 = vpop.f32.mrb[0].mxu0
    %v1638 = vpop.f32.mrb[0].mxu0
    %v1639 = vadd.f32 %v1495, %v1638
    %v1640 = vpop.f32.mrb[0].mxu0
    %1641 = vmatprep.mubr.bf16.mxu0 0
    %1642 = vmatmul.mubr.bf16.gmra.mrb[0].mxu0 %v1463
    %v1643 = vpop.f32.mrb[0].mxu0
    %v1644 = vadd.f32 %v1495, %v1643
    %v1645 = vpop.f32.mrb[0].mxu0
    %v1646 = vpop.f32.mrb[0].mxu0
    %v1647 = vadd.f32 %v1495, %v1646
    %v1648 = vpop.f32.mrb[0].mxu0
    %1649 = vmatprep.mubr.bf16.mxu0 0
    %1650 = vmatmul.mubr.bf16.gmra.mrb[0].mxu0 %v1464
    %v1651 = vpop.f32.mrb[0].mxu0
    %v1652 = vadd.f32 %v1495, %v1651
    %v1653 = vpop.f32.mrb[0].mxu0
    %v1654 = vpop.f32.mrb[0].mxu0
    %v1655 = vadd.f32 %v1495, %v1654
    %v1656 = vpop.f32.mrb[0].mxu0
    %1657 = vmatprep.mubr.bf16.mxu0 0
    %1658 = vmatmul.mubr.bf16.gmra.mrb[0].mxu0 %v1465
    %v1659 = vpop.f32.mrb[0].mxu0
    %v1660 = vadd.f32 %v1495, %v1659
    %v1661 = vpop.f32.mrb[0].mxu0
    %v1662 = vpop.f32.mrb[0].mxu0
    %v1663 = vadd.f32 %v1495, %v1662
    %v1664 = vpop.f32.mrb[0].mxu0
    %1665 = vmatprep.mubr.bf16.mxu0 0
    %1666 = vmatmul.mubr.bf16.gmra.mrb[0].mxu0 %v1466
    %v1667 = vpop.f32.mrb[0].mxu0
    %v1668 = vadd.f32 %v1495, %v1667
    %v1669 = vpop.f32.mrb[0].mxu0
    %v1670 = vpop.f32.mrb[0].mxu0
    %v1671 = vadd.f32 %v1495, %v1670
    %v1672 = vpop.f32.mrb[0].mxu0
    %1673 = vmatprep.mubr.bf16.mxu0 0
    %1674 = vmatmul.mubr.bf16.gmra.mrb[0].mxu0 %v1467
    %v1675 = vpop.f32.mrb[0].mxu0
    %v1676 = vadd.f32 %v1495, %v1675
    %v1677 = vpop.f32.mrb[0].mxu0
    %v1678 = vpop.f32.mrb[0].mxu0
    %v1679 = vadd.f32 %v1495, %v1678
    %v1680 = vpop.f32.mrb[0].mxu0
    %1681 = vmatprep.mubr.bf16.mxu0 0
    %1682 = vmatmul.mubr.bf16.gmra.mrb[0].mxu0 %v1468
    %v1683 = vpop.f32.mrb[0].mxu0
    %v1684 = vadd.f32 %v1495, %v1683
    %v1685 = vpop.f32.mrb[0].mxu0
    %v1686 = vpop.f32.mrb[0].mxu0
    %v1687 = vadd.f32 %v1495, %v1686
    %v1688 = vpop.f32.mrb[0].mxu0
    %1689 = vmatprep.mubr.bf16.mxu0 0
    %1690 = vmatmul.mubr.bf16.gmra.mrb[0].mxu0 %v1469
    %v1691 = vpop.f32.mrb[0].mxu0
    %v1692 = vadd.f32 %v1495, %v1691
    %v1693 = vpop.f32.mrb[0].mxu0
    %v1694 = vpop.f32.mrb[0].mxu0
    %v1695 = vadd.f32 %v1495, %v1694
    %v1696 = vpop.f32.mrb[0].mxu0
    %1697 = vmatprep.mubr.bf16.mxu0 0
    %1698 = vmatmul.mubr.bf16.gmra.mrb[0].mxu0 %v1470
    %v1699 = vpop.f32.mrb[0].mxu0
    %v1700 = vadd.f32 %v1495, %v1699
    %v1701 = vpop.f32.mrb[0].mxu0
    %v1702 = vpop.f32.mrb[0].mxu0
    %v1703 = vadd.f32 %v1495, %v1702
    %v1704 = vpop.f32.mrb[0].mxu0
    %1705 = vmatprep.mubr.bf16.mxu0 0
    %1706 = vmatmul.mubr.bf16.gmra.mrb[0].mxu0 %v1471
    %v1707 = vpop.f32.mrb[0].mxu0
    %v1708 = vadd.f32 %v1495, %v1707
    %v1709 = vpop.f32.mrb[0].mxu0
    %v1710 = vpop.f32.mrb[0].mxu0
    %v1711 = vadd.f32 %v1495, %v1710
    %v1712 = vpop.f32.mrb[0].mxu0
    %1713 = vmatprep.mubr.bf16.mxu0 0
    %1714 = vmatmul.mubr.bf16.gmra.mrb[0].mxu0 %v1472
    %v1715 = vpop.f32.mrb[0].mxu0
    %v1716 = vadd.f32 %v1495, %v1715
    %v1717 = vpop.f32.mrb[0].mxu0
    %v1718 = vpop.f32.mrb[0].mxu0
    %v1719 = vadd.f32 %v1495, %v1718
    %v1720 = vpop.f32.mrb[0].mxu0
    %1721 = vmatprep.mubr.bf16.mxu0 0
    %1722 = vmatmul.mubr.bf16.gmra.mrb[0].mxu0 %v1473
    %v1723 = vpop.f32.mrb[0].mxu0
    %v1724 = vadd.f32 %v1495, %v1723
    %v1725 = vpop.f32.mrb[0].mxu0
    %v1726 = vpop.f32.mrb[0].mxu0
    %v1727 = vadd.f32 %v1495, %v1726
    %v1728 = vpop.f32.mrb[0].mxu0
    %1729 = vdwg.mxu0
    %1730 = vst [vmem:[#allocation2] sm:$0xff] %v1580
    %1731 = vst [vmem:[#allocation2 + $0x8] sm:$0xff] %v1583
    %1732 = vst [vmem:[#allocation2 + $0x10] sm:$0xff] %v1588
    %1733 = vst [vmem:[#allocation2 + $0x18] sm:$0xff] %v1591
    %1734 = vst [vmem:[#allocation2 + $0x20] sm:$0xff] %v1596
    %1735 = vst [vmem:[#allocation2 + $0x28] sm:$0xff] %v1599
    %1736 = vst [vmem:[#allocation2 + $0x30] sm:$0xff] %v1604
    %1737 = vst [vmem:[#allocation2 + $0x38] sm:$0xff] %v1607
    %1738 = vst [vmem:[#allocation2 + $0x40] sm:$0xff] %v1612
    %1739 = vst [vmem:[#allocation2 + $0x48] sm:$0xff] %v1615
    %1740 = vst [vmem:[#allocation2 + $0x50] sm:$0xff] %v1620
    %1741 = vst [vmem:[#allocation2 + $0x58] sm:$0xff] %v1623
    %1742 = vst [vmem:[#allocation2 + $0x60] sm:$0xff] %v1628
    %1743 = vst [vmem:[#allocation2 + $0x68] sm:$0xff] %v1631
    %1744 = vst [vmem:[#allocation2 + $0x70] sm:$0xff] %v1636
    %1745 = vst [vmem:[#allocation2 + $0x78] sm:$0xff] %v1639
    %1746 = vst [vmem:[#allocation2 + $0x80] sm:$0xff] %v1644
    %1747 = vst [vmem:[#allocation2 + $0x88] sm:$0xff] %v1647
    %1748 = vst [vmem:[#allocation2 + $0x90] sm:$0xff] %v1652
    %1749 = vst [vmem:[#allocation2 + $0x98] sm:$0xff] %v1655
    %1750 = vst [vmem:[#allocation2 + $0xa0] sm:$0xff] %v1660
    %1751 = vst [vmem:[#allocation2 + $0xa8] sm:$0xff] %v1663
    %1752 = vst [vmem:[#allocation2 + $0xb0] sm:$0xff] %v1668
    %1753 = vst [vmem:[#allocation2 + $0xb8] sm:$0xff] %v1671
    %1754 = vst [vmem:[#allocation2 + $0xc0] sm:$0xff] %v1676
    %1755 = vst [vmem:[#allocation2 + $0xc8] sm:$0xff] %v1679
    %1756 = vst [vmem:[#allocation2 + $0xd0] sm:$0xff] %v1684
    %1757 = vst [vmem:[#allocation2 + $0xd8] sm:$0xff] %v1687
    %1758 = vst [vmem:[#allocation2 + $0xe0] sm:$0xff] %v1692
    %1759 = vst [vmem:[#allocation2 + $0xe8] sm:$0xff] %v1695
    %1760 = vst [vmem:[#allocation2 + $0xf0] sm:$0xff] %v1700
    %1761 = vst [vmem:[#allocation2 + $0xf8] sm:$0xff] %v1703
    %1762 = vst [vmem:[#allocation2 + $0x100] sm:$0xff] %v1708
    %1763 = vst [vmem:[#allocation2 + $0x108] sm:$0xff] %v1711
    %1764 = vst [vmem:[#allocation2 + $0x110] sm:$0xff] %v1716
    %1765 = vst [vmem:[#allocation2 + $0x118] sm:$0xff] %v1719
    %1766 = vst [vmem:[#allocation2 + $0x120] sm:$0xff] %v1724
    %1767 = vst [vmem:[#allocation2 + $0x128] sm:$0xff] %v1727
    // Predicated region
    $region38: #{tpu_custom_call.1} parent=1 // pred_check
      _
    $region39: #{tpu_custom_call.1} parent=1 // pred_check_branch
      %1769 = sbr.rel (0) target = $region41
    $region40: #{tpu_custom_call.1} parent=1 // pred_region
      %s1771 = ssub.s32 4864, 4864
      %1772 = vsyncadd [#allocation3], %s1771
      %s1773 = sshll.u32 [#allocation2], 4
      %s1774 = int_to_ptr.vmem [resolvable:$true] %s1773
      %1779 = dma.vmem_to_hbm [thread:$0]  %s1774, 4864, %s9, [#allocation3], 128, 128, 8
    $region41: #{tpu_custom_call.1} parent=1 // pred_fallthru
      _
    // Predicated region
    $region42: #{tpu_custom_call.1} parent=1 // pred_check
      _
    $region43: #{tpu_custom_call.1} parent=1 // pred_check_branch
      %1781 = sbr.rel (0) target = $region45
    $region44: #{tpu_custom_call.1} parent=1 // pred_region
      %1782 = dma.done [#allocation3], 4864
    $region45: #{tpu_custom_call.1} parent=1 // pred_fallthru
      _
    %1783 = vsyncpa [#allocation3], 1

</llo_original>
